<compile_context>
chip_gen: v6e
topology: v6e:2x2x1
jax: 0.10.0
libtpu: 0.0.40
codegen_flags: <defaults>
</compile_context>

<pallas_src>
import functools

import jax
import jax.numpy as jnp
import numpy as np
from jax.experimental import pallas as pl
from jax.experimental.pallas import tpu as pltpu

EPS = 1e-5  # PyTorch BatchNorm2d default


# --------------------------------------------------------------------------
# Host-side (one-time) weight packing
# --------------------------------------------------------------------------
def _round_up(v, m):
    return (v + m - 1) // m * m


def pack_gate_params(params, spatial_hw):
    """Pack Gate parameters into kernel-friendly layouts (one-time, host side)."""
    (w1, b1, g1, bt1, w2, b2, g2, bt2,
     wcg1, bcg1, wfc, bfc, wcg2, bcg2) = params
    del b1, b2  # per-channel conv biases cancel exactly under batch-statistics BN

    hi, wi = spatial_hw
    kh1, kw1, ci, c1 = np.asarray(w1).shape
    kh2, kw2, c1b, c2 = np.asarray(w2).shape
    assert c1b == c1
    wo1 = wi - kw1 + 1
    wo2 = wo1 - kw2 + 1
    m1 = wo1 * c1
    m1p = _round_up(m1, 128)          # lane-pad conv1 output width to 128
    assert m1p % c1 == 0
    m2 = wo2 * c2
    num_task = np.asarray(wfc).shape[1]

    # conv1 Toeplitz, kernel-row (ky) folded into the contraction dim:
    #   (KH1*Wi*Ci, M1p)   lane layout of outputs = ox*C1 + c
    w1n = np.asarray(w1, np.float32)
    t1 = np.zeros((kh1, wi * ci, m1p), np.float32)
    for ky in range(kh1):
        for kx in range(kw1):
            for ox in range(wo1):
                t1[ky, (ox + kx) * ci:(ox + kx + 1) * ci,
                       ox * c1:(ox + 1) * c1] = w1n[ky, kx]
    t1big = jnp.asarray(t1.reshape(kh1 * wi * ci, m1p), jnp.bfloat16)

    # conv2 Toeplitz over the (lane-padded) y1 layout: (KH2*M1p, M2)
    w2n = np.asarray(w2, np.float32)
    t2 = np.zeros((kh2, m1p, m2), np.float32)
    for ky in range(kh2):
        for kx in range(kw2):
            for ox in range(wo2):
                t2[ky, (ox + kx) * c1:(ox + kx + 1) * c1,
                       ox * c2:(ox + 1) * c2] = w2n[ky, kx]
    t2big = jnp.asarray(t2.reshape(kh2 * m1p, m2), jnp.bfloat16)

    # All small parameters consolidated into ONE f32 slab -> single DMA.
    rows = _round_up(8 + 2 * c2 + num_task, 8)
    aux = np.zeros((rows, c2), np.float32)
    aux[0, :c1] = np.asarray(g1, np.float32)
    aux[1, :c1] = np.asarray(bt1, np.float32)
    aux[2, :c2] = np.asarray(g2, np.float32)
    aux[3, :c2] = np.asarray(bt2, np.float32)
    aux[4, :c2] = np.asarray(bcg1, np.float32)
    aux[5, :num_task] = np.asarray(bfc, np.float32)
    aux[6, :num_task] = np.asarray(bcg2, np.float32)
    aux[8:8 + c2, :c2] = np.asarray(wcg1, np.float32)
    aux[8 + c2:8 + 2 * c2, :num_task] = np.asarray(wfc, np.float32)
    aux[8 + 2 * c2:8 + 2 * c2 + num_task, :num_task] = np.asarray(wcg2, np.float32)
    aux = jnp.asarray(aux)

    dims = (kh1, kw1, ci, c1, kh2, kw2, c2, num_task)
    return (t1big, aux, t2big), dims


# --------------------------------------------------------------------------
# In-kernel helpers
# --------------------------------------------------------------------------
def _tiled_eye(k, rep_rows, rep_cols):
    """(k*rep_rows, k*rep_cols) block-tiled identity, built from iota (no DMA)."""
    a = jax.lax.broadcasted_iota(jnp.int32, (k, k), 0)
    b = jax.lax.broadcasted_iota(jnp.int32, (k, k), 1)
    eye = (a == b).astype(jnp.float32)
    return jnp.tile(eye, (rep_rows, rep_cols))


# --------------------------------------------------------------------------
# Fused Gate forward kernel
# --------------------------------------------------------------------------
def _gate_kernel(x_ref, t1_ref, aux_ref, t2_hbm,       # inputs
                 out_ref,                              # output (N, num_task)
                 t2_vmem, sem,                         # scratch
                 *, n, ho1, wo1, ho2, wo2, c1, c2, m1p, m2, kh2, num_task):
    f32 = jnp.float32

    # Kick off the dominant weight DMA (conv2 Toeplitz, bf16) so it overlaps
    # with conv1 + BN1 + im2col work below.
    t2_copy = pltpu.make_async_copy(t2_hbm, t2_vmem, sem)
    t2_copy.start()

    # ---- Stage 1: conv1 as ONE MXU matmul, K = KH1*Wi*Ci ------------------
    a1 = jnp.dot(x_ref[...], t1_ref[...],
                 preferred_element_type=f32)           # (n*ho1, m1p) f32

    # ---- BN1 (training-mode batch statistics) folded into a per-lane FMA --
    sum1 = jnp.sum(a1, axis=0, keepdims=True)          # (1, m1p)
    sq1 = jnp.sum(a1 * a1, axis=0, keepdims=True)
    fold1 = _tiled_eye(c1, m1p // c1, 1)               # (m1p, c1) lane->channel
    bcast1 = _tiled_eye(c1, 1, m1p // c1)              # (c1, m1p) channel->lane
    inv_cnt1 = 1.0 / float(n * ho1 * wo1)
    mean1 = jnp.dot(sum1, fold1, preferred_element_type=f32) * inv_cnt1
    ex2_1 = jnp.dot(sq1, fold1, preferred_element_type=f32) * inv_cnt1
    var1 = ex2_1 - mean1 * mean1
    g1 = aux_ref[0:1, 0:c1]
    bt1 = aux_ref[1:2, 0:c1]
    sc1 = g1 * jax.lax.rsqrt(var1 + EPS)
    of1 = bt1 - mean1 * sc1
    s_lane1 = jnp.dot(sc1, bcast1, preferred_element_type=f32)   # (1, m1p)
    t_lane1 = jnp.dot(of1, bcast1, preferred_element_type=f32)

    y1 = jnp.maximum(a1 * s_lane1 + t_lane1, 0.0)      # (n*ho1, m1p) f32
    # (pad lanes of y1 never reach conv2: the matching t2 rows are zero)

    # ---- Build conv2 im2col LHS: (n*ho2, kh2*m1p), 128-aligned lane concat -
    cols = []
    for ky in range(kh2):
        rows = [y1[s * ho1 + ky: s * ho1 + ky + ho2, :] for s in range(n)]
        cols.append(jnp.concatenate(rows, axis=0))     # (n*ho2, m1p)
    lhs2 = jnp.concatenate(cols, axis=1).astype(jnp.bfloat16)

    # ---- Stage 2: conv2 as ONE MXU matmul, K = KH2*M1p --------------------
    t2_copy.wait()                                     # weight DMA now needed
    a2 = jnp.dot(lhs2, t2_vmem[...],
                 preferred_element_type=f32)           # (n*ho2, m2) f32

    # ---- BN2 + ReLU --------------------------------------------------------
    sum2 = jnp.sum(a2, axis=0, keepdims=True)
    sq2 = jnp.sum(a2 * a2, axis=0, keepdims=True)
    fold2 = _tiled_eye(c2, m2 // c2, 1)                # (m2, c2)
    bcast2 = _tiled_eye(c2, 1, m2 // c2)               # (c2, m2)
    inv_cnt2 = 1.0 / float(n * ho2 * wo2)
    mean2 = jnp.dot(sum2, fold2, preferred_element_type=f32) * inv_cnt2
    ex2_2 = jnp.dot(sq2, fold2, preferred_element_type=f32) * inv_cnt2
    var2 = ex2_2 - mean2 * mean2
    g2 = aux_ref[2:3, 0:c2]
    bt2 = aux_ref[3:4, 0:c2]
    sc2 = g2 * jax.lax.rsqrt(var2 + EPS)
    of2 = bt2 - mean2 * sc2
    s_lane2 = jnp.dot(sc2, bcast2, preferred_element_type=f32)   # (1, m2)
    t_lane2 = jnp.dot(of2, bcast2, preferred_element_type=f32)

    y2 = jnp.maximum(a2 * s_lane2 + t_lane2, 0.0)      # (n*ho2, m2)

    # ---- Global average pool -> (n, c2) ------------------------------------
    pooled_lane = jnp.concatenate(
        [jnp.sum(y2[s * ho2:(s + 1) * ho2, :], axis=0, keepdims=True)
         for s in range(n)], axis=0)                   # (n, m2)
    pooled = jnp.dot(pooled_lane, fold2,
                     preferred_element_type=f32) * (1.0 / float(ho2 * wo2))

    # ---- ContextGating -> Linear -> ContextGating -> Softmax ---------------
    wcg1 = aux_ref[8:8 + c2, 0:c2]
    wfc = aux_ref[8 + c2:8 + 2 * c2, 0:num_task]
    wcg2 = aux_ref[8 + 2 * c2:8 + 2 * c2 + num_task, 0:num_task]
    bcg1 = aux_ref[4:5, 0:c2]
    bfc = aux_ref[5:6, 0:num_task]
    bcg2 = aux_ref[6:7, 0:num_task]

    pre1 = jnp.dot(pooled, wcg1, preferred_element_type=f32) + bcg1
    z = pooled * pl.reciprocal(1.0 + jnp.exp(-pre1), approx=True)   # sigmoid gate
    f = jnp.dot(z, wfc, preferred_element_type=f32) + bfc           # (n, num_task)
    pre2 = jnp.dot(f, wcg2, preferred_element_type=f32) + bcg2
    f = f * pl.reciprocal(1.0 + jnp.exp(-pre2), approx=True)

    f = f - jnp.max(f, axis=1, keepdims=True)
    e = jnp.exp(f)
    out_ref[...] = e * pl.reciprocal(jnp.sum(e, axis=1, keepdims=True), approx=True)


# --------------------------------------------------------------------------
# Wrapper
# --------------------------------------------------------------------------
@functools.partial(jax.jit, static_argnames=("dims",))
def gate_pallas(x_nchw, packed, dims):
    """Gate.forward.  x: (N, Cin, H, W) NCHW -> (N, num_task) softmax probs."""
    kh1, kw1, ci, c1, kh2, kw2, c2, num_task = dims
    t1big, aux, t2big = packed
    n, ci_x, hi, wi = x_nchw.shape
    assert ci_x == ci
    ho1, wo1 = hi - kh1 + 1, wi - kw1 + 1
    ho2, wo2 = ho1 - kh2 + 1, wo1 - kw2 + 1
    m1p = t1big.shape[1]
    m2 = wo2 * c2

    # Layout plumbing only (input is ~4 KiB): NCHW -> lane-dense (W*C) rows,
    # then im2col over the KH1 kernel rows so conv1 is one K=KH1*Wi*Ci matmul.
    x_rows = jnp.transpose(x_nchw, (0, 2, 3, 1)).astype(jnp.float32) \
                .reshape(n, hi, wi * ci)
    x_cols = jnp.concatenate([x_rows[:, ky:ky + ho1, :] for ky in range(kh1)],
                             axis=-1).reshape(n * ho1, kh1 * wi * ci)
    x_cols = x_cols.astype(jnp.bfloat16)

    kernel = functools.partial(
        _gate_kernel, n=n, ho1=ho1, wo1=wo1, ho2=ho2, wo2=wo2,
        c1=c1, c2=c2, m1p=m1p, m2=m2, kh2=kh2, num_task=num_task)

    vmem = pl.BlockSpec(memory_space=pltpu.MemorySpace.VMEM)
    return pl.pallas_call(
        kernel,
        out_shape=jax.ShapeDtypeStruct((n, num_task), jnp.float32),
        in_specs=[vmem, vmem, vmem,
                  pl.BlockSpec(memory_space=pl.ANY)],   # t2 stays in HBM; manual DMA
        out_specs=vmem,
        scratch_shapes=[pltpu.VMEM((kh2 * m1p, m2), jnp.bfloat16),
                        pltpu.SemaphoreType.DMA],
    )(x_cols, t1big, aux, t2big)


# --------------------------------------------------------------------------
# Pure-JAX reference (training-mode BN batch statistics) for validation
# --------------------------------------------------------------------------
def _bn_relu_ref(y, g, b):
    mean = jnp.mean(y, axis=(0, 2, 3), keepdims=True)
    var = jnp.mean((y - mean) ** 2, axis=(0, 2, 3), keepdims=True)
    y = (y - mean) * jax.lax.rsqrt(var + EPS) * g.reshape(1, -1, 1, 1) \
        + b.reshape(1, -1, 1, 1)
    return jnp.maximum(y, 0.0)


def gate_ref(x_nchw, params):
    (w1, b1, g1, bt1, w2, b2, g2, bt2,
     wcg1, bcg1, wfc, bfc, wcg2, bcg2) = params
    x = x_nchw.astype(jnp.float32)
    y = jax.lax.conv_general_dilated(
        x, jnp.transpose(w1, (3, 2, 0, 1)), (1, 1), "VALID",
        dimension_numbers=("NCHW", "OIHW", "NCHW"),
        precision=jax.lax.Precision.HIGHEST) + b1.reshape(1, -1, 1, 1)
    y = _bn_relu_ref(y, g1, bt1)
    y = jax.lax.conv_general_dilated(
        y, jnp.transpose(w2, (3, 2, 0, 1)), (1, 1), "VALID",
        dimension_numbers=("NCHW", "OIHW", "NCHW"),
        precision=jax.lax.Precision.HIGHEST) + b2.reshape(1, -1, 1, 1)
    y = _bn_relu_ref(y, g2, bt2)
    pooled = jnp.mean(y, axis=(2, 3))                  # avgpool(1,1) + squeeze
    z = pooled * jax.nn.sigmoid(pooled @ wcg1 + bcg1)
    f = z @ wfc + bfc
    f = f * jax.nn.sigmoid(f @ wcg2 + bcg2)
    return jax.nn.softmax(f, axis=1)


if __name__ == "__main__":
    # Gate(in_channel=4, out_channel=8, num_task=3) on a (2, 4, 16, 16) input.
    N, IN_CH, OUT_CH, H, W, NUM_TASK = 2, 4, 8, 16, 16, 3
    C2 = OUT_CH * 4

    key = jax.random.PRNGKey(0)
    ks = jax.random.split(key, 15)
    x = jax.random.normal(ks[0], (N, IN_CH, H, W), jnp.float32)

    # Synthetic parameters.  Conv weights in HWIO; linear weights in (in, out) layout.
    w1 = jax.random.normal(ks[1], (4, 4, IN_CH, OUT_CH), jnp.float32) * 0.2
    b1 = 0.1 * jax.random.normal(ks[2], (OUT_CH,), jnp.float32)
    g1 = 1.0 + 0.1 * jax.random.normal(ks[3], (OUT_CH,), jnp.float32)
    bt1 = 0.1 * jax.random.normal(ks[4], (OUT_CH,), jnp.float32)
    w2 = jax.random.normal(ks[5], (8, 8, OUT_CH, C2), jnp.float32) * 0.05
    b2 = 0.1 * jax.random.normal(ks[6], (C2,), jnp.float32)
    g2 = 1.0 + 0.1 * jax.random.normal(ks[7], (C2,), jnp.float32)
    bt2 = 0.1 * jax.random.normal(ks[8], (C2,), jnp.float32)
    wcg1 = jax.random.normal(ks[9], (C2, C2), jnp.float32) * 0.2
    bcg1 = 0.1 * jax.random.normal(ks[10], (C2,), jnp.float32)
    wfc = jax.random.normal(ks[11], (C2, NUM_TASK), jnp.float32) * 0.2
    bfc = 0.1 * jax.random.normal(ks[12], (NUM_TASK,), jnp.float32)
    wcg2 = jax.random.normal(ks[13], (NUM_TASK, NUM_TASK), jnp.float32) * 0.2
    bcg2 = 0.1 * jax.random.normal(ks[14], (NUM_TASK,), jnp.float32)
    params = (w1, b1, g1, bt1, w2, b2, g2, bt2,
              wcg1, bcg1, wfc, bfc, wcg2, bcg2)

    packed, dims = pack_gate_params(params, (H, W))
    out = gate_pallas(x, packed, dims=dims)
    jax.block_until_ready(out)

    ref = gate_ref(x, params)
    # bf16 MXU operands (native dtype) -> slightly wider tolerance than pure f32.
    np.testing.assert_allclose(np.asarray(out), np.asarray(ref), rtol=2e-2, atol=2e-2)
    assert out.shape == (N, NUM_TASK)
    print("KERNEL_OK")
</pallas_src>

<mosaic_0001>
module attributes {stable_mosaic.version = 11 : i64} {
  func.func @_gate_kernel(%arg0: memref<26x256xbf16, #tpu.memory_space<vmem>>, %arg1: memref<256x128xbf16, #tpu.memory_space<vmem>>, %arg2: memref<80x32xf32, #tpu.memory_space<vmem>>, %arg3: memref<1024x192xbf16, #tpu.memory_space<any>>, %arg4: memref<2x3xf32, #tpu.memory_space<vmem>>, %arg5: memref<1024x192xbf16, #tpu.memory_space<vmem>>, %arg6: memref<!tpu.dma_semaphore, #tpu.memory_space<semaphore_mem>>) attributes {dimension_semantics = [], scalar_prefetch = 0 : i64, scratch_operands = 2 : i64, tpu.core_type = #tpu.core_type<tc>} {
    tpu.enqueue_dma source(%arg3 : memref<1024x192xbf16, #tpu.memory_space<any>>) target(%arg5 : memref<1024x192xbf16, #tpu.memory_space<vmem>>) target_semaphore(%arg6 : memref<!tpu.dma_semaphore, #tpu.memory_space<semaphore_mem>>)
    %c0 = arith.constant 0 : index
    %c0_0 = arith.constant 0 : index
    %0 = vector.load %arg0[%c0, %c0_0] : memref<26x256xbf16, #tpu.memory_space<vmem>>, vector<26x256xbf16>
    %c0_1 = arith.constant 0 : index
    %c0_2 = arith.constant 0 : index
    %1 = vector.load %arg1[%c0_1, %c0_2] : memref<256x128xbf16, #tpu.memory_space<vmem>>, vector<256x128xbf16>
    %cst = arith.constant dense<0.000000e+00> : vector<26x128xf32>
    %2 = tpu.matmul %0, %1, %cst {dimension_numbers = #tpu.dot_dimension_numbers<[1], [0], [0], [1], [0, 0, 1, 1], [], []>} : vector<26x256xbf16>, vector<256x128xbf16>, vector<26x128xf32> -> vector<26x128xf32>
    %cst_3 = arith.constant dense<0.000000e+00> : vector<128xf32>
    %3 = vector.multi_reduction <add>, %2, %cst_3 [0] : vector<26x128xf32> to vector<128xf32>
    %4 = vector.shape_cast %3 : vector<128xf32> to vector<1x128xf32>
    %5 = arith.mulf %2, %2 : vector<26x128xf32>
    %cst_4 = arith.constant dense<0.000000e+00> : vector<128xf32>
    %6 = vector.multi_reduction <add>, %5, %cst_4 [0] : vector<26x128xf32> to vector<128xf32>
    %7 = vector.shape_cast %6 : vector<128xf32> to vector<1x128xf32>
    %8 = tpu.iota {dimensions = array<i32: 0>} : vector<8x8xi32>
    %9 = tpu.iota {dimensions = array<i32: 1>} : vector<8x8xi32>
    %10 = arith.cmpi eq, %8, %9 : vector<8x8xi32>
    %11 = arith.extui %10 : vector<8x8xi1> to vector<8x8xi32>
    %12 = arith.sitofp %11 : vector<8x8xi32> to vector<8x8xf32>
    %13 = tpu.concatenate %12, %12, %12, %12, %12, %12, %12, %12, %12, %12, %12, %12, %12, %12, %12, %12 in 0 : vector<8x8xf32>, vector<8x8xf32>, vector<8x8xf32>, vector<8x8xf32>, vector<8x8xf32>, vector<8x8xf32>, vector<8x8xf32>, vector<8x8xf32>, vector<8x8xf32>, vector<8x8xf32>, vector<8x8xf32>, vector<8x8xf32>, vector<8x8xf32>, vector<8x8xf32>, vector<8x8xf32>, vector<8x8xf32> -> vector<128x8xf32>
    %14 = tpu.iota {dimensions = array<i32: 0>} : vector<8x8xi32>
    %15 = tpu.iota {dimensions = array<i32: 1>} : vector<8x8xi32>
    %16 = arith.cmpi eq, %14, %15 : vector<8x8xi32>
    %17 = arith.extui %16 : vector<8x8xi1> to vector<8x8xi32>
    %18 = arith.sitofp %17 : vector<8x8xi32> to vector<8x8xf32>
    %19 = tpu.concatenate %18, %18, %18, %18, %18, %18, %18, %18, %18, %18, %18, %18, %18, %18, %18, %18 in 1 : vector<8x8xf32>, vector<8x8xf32>, vector<8x8xf32>, vector<8x8xf32>, vector<8x8xf32>, vector<8x8xf32>, vector<8x8xf32>, vector<8x8xf32>, vector<8x8xf32>, vector<8x8xf32>, vector<8x8xf32>, vector<8x8xf32>, vector<8x8xf32>, vector<8x8xf32>, vector<8x8xf32>, vector<8x8xf32> -> vector<8x128xf32>
    %cst_5 = arith.constant dense<0.000000e+00> : vector<1x8xf32>
    %20 = tpu.matmul %4, %13, %cst_5 {dimension_numbers = #tpu.dot_dimension_numbers<[1], [0], [0], [1], [0, 0, 1, 1], [], []>} : vector<1x128xf32>, vector<128x8xf32>, vector<1x8xf32> -> vector<1x8xf32>
    %cst_6 = arith.constant 2.958580e-03 : f32
    %21 = vector.broadcast %cst_6 : f32 to vector<1x8xf32>
    %22 = arith.mulf %20, %21 : vector<1x8xf32>
    %cst_7 = arith.constant dense<0.000000e+00> : vector<1x8xf32>
    %23 = tpu.matmul %7, %13, %cst_7 {dimension_numbers = #tpu.dot_dimension_numbers<[1], [0], [0], [1], [0, 0, 1, 1], [], []>} : vector<1x128xf32>, vector<128x8xf32>, vector<1x8xf32> -> vector<1x8xf32>
    %cst_8 = arith.constant 2.958580e-03 : f32
    %24 = vector.broadcast %cst_8 : f32 to vector<1x8xf32>
    %25 = arith.mulf %23, %24 : vector<1x8xf32>
    %26 = arith.mulf %22, %22 : vector<1x8xf32>
    %27 = arith.subf %25, %26 : vector<1x8xf32>
    %c0_9 = arith.constant 0 : index
    %c0_10 = arith.constant 0 : index
    %28 = vector.load %arg2[%c0_9, %c0_10] : memref<80x32xf32, #tpu.memory_space<vmem>>, vector<1x8xf32>
    %c1 = arith.constant 1 : index
    %c0_11 = arith.constant 0 : index
    %29 = vector.load %arg2[%c1, %c0_11] : memref<80x32xf32, #tpu.memory_space<vmem>>, vector<1x8xf32>
    %cst_12 = arith.constant 9.99999974E-6 : f32
    %30 = vector.broadcast %cst_12 : f32 to vector<1x8xf32>
    %31 = arith.addf %27, %30 : vector<1x8xf32>
    %32 = math.rsqrt %31 : vector<1x8xf32>
    %33 = arith.mulf %28, %32 : vector<1x8xf32>
    %34 = arith.mulf %22, %33 : vector<1x8xf32>
    %35 = arith.subf %29, %34 : vector<1x8xf32>
    %cst_13 = arith.constant dense<0.000000e+00> : vector<1x128xf32>
    %36 = tpu.matmul %33, %19, %cst_13 {dimension_numbers = #tpu.dot_dimension_numbers<[1], [0], [0], [1], [0, 0, 1, 1], [], []>} : vector<1x8xf32>, vector<8x128xf32>, vector<1x128xf32> -> vector<1x128xf32>
    %cst_14 = arith.constant dense<0.000000e+00> : vector<1x128xf32>
    %37 = tpu.matmul %35, %19, %cst_14 {dimension_numbers = #tpu.dot_dimension_numbers<[1], [0], [0], [1], [0, 0, 1, 1], [], []>} : vector<1x8xf32>, vector<8x128xf32>, vector<1x128xf32> -> vector<1x128xf32>
    %38 = vector.broadcast %36 : vector<1x128xf32> to vector<26x128xf32>
    %39 = arith.mulf %2, %38 : vector<26x128xf32>
    %40 = vector.broadcast %37 : vector<1x128xf32> to vector<26x128xf32>
    %41 = arith.addf %39, %40 : vector<26x128xf32>
    %cst_15 = arith.constant 0.000000e+00 : f32
    %42 = vector.broadcast %cst_15 : f32 to vector<26x128xf32>
    %43 = arith.maximumf %41, %42 : vector<26x128xf32>
    %44 = vector.extract_strided_slice %43 {offsets = [0, 0], sizes = [6, 128], strides = [1, 1]} : vector<26x128xf32> to vector<6x128xf32>
    %45 = vector.extract_strided_slice %43 {offsets = [13, 0], sizes = [6, 128], strides = [1, 1]} : vector<26x128xf32> to vector<6x128xf32>
    %46 = tpu.concatenate %44, %45 in 0 : vector<6x128xf32>, vector<6x128xf32> -> vector<12x128xf32>
    %47 = vector.extract_strided_slice %43 {offsets = [1, 0], sizes = [6, 128], strides = [1, 1]} : vector<26x128xf32> to vector<6x128xf32>
    %48 = vector.extract_strided_slice %43 {offsets = [14, 0], sizes = [6, 128], strides = [1, 1]} : vector<26x128xf32> to vector<6x128xf32>
    %49 = tpu.concatenate %47, %48 in 0 : vector<6x128xf32>, vector<6x128xf32> -> vector<12x128xf32>
    %50 = vector.extract_strided_slice %43 {offsets = [2, 0], sizes = [6, 128], strides = [1, 1]} : vector<26x128xf32> to vector<6x128xf32>
    %51 = vector.extract_strided_slice %43 {offsets = [15, 0], sizes = [6, 128], strides = [1, 1]} : vector<26x128xf32> to vector<6x128xf32>
    %52 = tpu.concatenate %50, %51 in 0 : vector<6x128xf32>, vector<6x128xf32> -> vector<12x128xf32>
    %53 = vector.extract_strided_slice %43 {offsets = [3, 0], sizes = [6, 128], strides = [1, 1]} : vector<26x128xf32> to vector<6x128xf32>
    %54 = vector.extract_strided_slice %43 {offsets = [16, 0], sizes = [6, 128], strides = [1, 1]} : vector<26x128xf32> to vector<6x128xf32>
    %55 = tpu.concatenate %53, %54 in 0 : vector<6x128xf32>, vector<6x128xf32> -> vector<12x128xf32>
    %56 = vector.extract_strided_slice %43 {offsets = [4, 0], sizes = [6, 128], strides = [1, 1]} : vector<26x128xf32> to vector<6x128xf32>
    %57 = vector.extract_strided_slice %43 {offsets = [17, 0], sizes = [6, 128], strides = [1, 1]} : vector<26x128xf32> to vector<6x128xf32>
    %58 = tpu.concatenate %56, %57 in 0 : vector<6x128xf32>, vector<6x128xf32> -> vector<12x128xf32>
    %59 = vector.extract_strided_slice %43 {offsets = [5, 0], sizes = [6, 128], strides = [1, 1]} : vector<26x128xf32> to vector<6x128xf32>
    %60 = vector.extract_strided_slice %43 {offsets = [18, 0], sizes = [6, 128], strides = [1, 1]} : vector<26x128xf32> to vector<6x128xf32>
    %61 = tpu.concatenate %59, %60 in 0 : vector<6x128xf32>, vector<6x128xf32> -> vector<12x128xf32>
    %62 = vector.extract_strided_slice %43 {offsets = [6, 0], sizes = [6, 128], strides = [1, 1]} : vector<26x128xf32> to vector<6x128xf32>
    %63 = vector.extract_strided_slice %43 {offsets = [19, 0], sizes = [6, 128], strides = [1, 1]} : vector<26x128xf32> to vector<6x128xf32>
    %64 = tpu.concatenate %62, %63 in 0 : vector<6x128xf32>, vector<6x128xf32> -> vector<12x128xf32>
    %65 = vector.extract_strided_slice %43 {offsets = [7, 0], sizes = [6, 128], strides = [1, 1]} : vector<26x128xf32> to vector<6x128xf32>
    %66 = vector.extract_strided_slice %43 {offsets = [20, 0], sizes = [6, 128], strides = [1, 1]} : vector<26x128xf32> to vector<6x128xf32>
    %67 = tpu.concatenate %65, %66 in 0 : vector<6x128xf32>, vector<6x128xf32> -> vector<12x128xf32>
    %68 = tpu.concatenate %46, %49, %52, %55, %58, %61, %64, %67 in 1 : vector<12x128xf32>, vector<12x128xf32>, vector<12x128xf32>, vector<12x128xf32>, vector<12x128xf32>, vector<12x128xf32>, vector<12x128xf32>, vector<12x128xf32> -> vector<12x1024xf32>
    %69 = arith.truncf %68 : vector<12x1024xf32> to vector<12x1024xbf16>
    tpu.wait_dma2 semaphore(%arg6 : memref<!tpu.dma_semaphore, #tpu.memory_space<semaphore_mem>>) src(%arg3 : memref<1024x192xbf16, #tpu.memory_space<any>>) dst(%arg5 : memref<1024x192xbf16, #tpu.memory_space<vmem>>)
    %c0_16 = arith.constant 0 : index
    %c0_17 = arith.constant 0 : index
    %70 = vector.load %arg5[%c0_16, %c0_17] : memref<1024x192xbf16, #tpu.memory_space<vmem>>, vector<1024x192xbf16>
    %cst_18 = arith.constant dense<0.000000e+00> : vector<12x192xf32>
    %71 = tpu.matmul %69, %70, %cst_18 {dimension_numbers = #tpu.dot_dimension_numbers<[1], [0], [0], [1], [0, 0, 1, 1], [], []>} : vector<12x1024xbf16>, vector<1024x192xbf16>, vector<12x192xf32> -> vector<12x192xf32>
    %cst_19 = arith.constant dense<0.000000e+00> : vector<192xf32>
    %72 = vector.multi_reduction <add>, %71, %cst_19 [0] : vector<12x192xf32> to vector<192xf32>
    %73 = vector.shape_cast %72 : vector<192xf32> to vector<1x192xf32>
    %74 = arith.mulf %71, %71 : vector<12x192xf32>
    %cst_20 = arith.constant dense<0.000000e+00> : vector<192xf32>
    %75 = vector.multi_reduction <add>, %74, %cst_20 [0] : vector<12x192xf32> to vector<192xf32>
    %76 = vector.shape_cast %75 : vector<192xf32> to vector<1x192xf32>
    %77 = tpu.iota {dimensions = array<i32: 0>} : vector<32x32xi32>
    %78 = tpu.iota {dimensions = array<i32: 1>} : vector<32x32xi32>
    %79 = arith.cmpi eq, %77, %78 : vector<32x32xi32>
    %80 = arith.extui %79 : vector<32x32xi1> to vector<32x32xi32>
    %81 = arith.sitofp %80 : vector<32x32xi32> to vector<32x32xf32>
    %82 = tpu.concatenate %81, %81, %81, %81, %81, %81 in 0 : vector<32x32xf32>, vector<32x32xf32>, vector<32x32xf32>, vector<32x32xf32>, vector<32x32xf32>, vector<32x32xf32> -> vector<192x32xf32>
    %83 = tpu.iota {dimensions = array<i32: 0>} : vector<32x32xi32>
    %84 = tpu.iota {dimensions = array<i32: 1>} : vector<32x32xi32>
    %85 = arith.cmpi eq, %83, %84 : vector<32x32xi32>
    %86 = arith.extui %85 : vector<32x32xi1> to vector<32x32xi32>
    %87 = arith.sitofp %86 : vector<32x32xi32> to vector<32x32xf32>
    %88 = tpu.concatenate %87, %87, %87, %87, %87, %87 in 1 : vector<32x32xf32>, vector<32x32xf32>, vector<32x32xf32>, vector<32x32xf32>, vector<32x32xf32>, vector<32x32xf32> -> vector<32x192xf32>
    %cst_21 = arith.constant dense<0.000000e+00> : vector<1x32xf32>
    %89 = tpu.matmul %73, %82, %cst_21 {dimension_numbers = #tpu.dot_dimension_numbers<[1], [0], [0], [1], [0, 0, 1, 1], [], []>} : vector<1x192xf32>, vector<192x32xf32>, vector<1x32xf32> -> vector<1x32xf32>
    %cst_22 = arith.constant 0.013888889 : f32
    %90 = vector.broadcast %cst_22 : f32 to vector<1x32xf32>
    %91 = arith.mulf %89, %90 : vector<1x32xf32>
    %cst_23 = arith.constant dense<0.000000e+00> : vector<1x32xf32>
    %92 = tpu.matmul %76, %82, %cst_23 {dimension_numbers = #tpu.dot_dimension_numbers<[1], [0], [0], [1], [0, 0, 1, 1], [], []>} : vector<1x192xf32>, vector<192x32xf32>, vector<1x32xf32> -> vector<1x32xf32>
    %cst_24 = arith.constant 0.013888889 : f32
    %93 = vector.broadcast %cst_24 : f32 to vector<1x32xf32>
    %94 = arith.mulf %92, %93 : vector<1x32xf32>
    %95 = arith.mulf %91, %91 : vector<1x32xf32>
    %96 = arith.subf %94, %95 : vector<1x32xf32>
    %c2 = arith.constant 2 : index
    %c0_25 = arith.constant 0 : index
    %97 = vector.load %arg2[%c2, %c0_25] : memref<80x32xf32, #tpu.memory_space<vmem>>, vector<1x32xf32>
    %c3 = arith.constant 3 : index
    %c0_26 = arith.constant 0 : index
    %98 = vector.load %arg2[%c3, %c0_26] : memref<80x32xf32, #tpu.memory_space<vmem>>, vector<1x32xf32>
    %cst_27 = arith.constant 9.99999974E-6 : f32
    %99 = vector.broadcast %cst_27 : f32 to vector<1x32xf32>
    %100 = arith.addf %96, %99 : vector<1x32xf32>
    %101 = math.rsqrt %100 : vector<1x32xf32>
    %102 = arith.mulf %97, %101 : vector<1x32xf32>
    %103 = arith.mulf %91, %102 : vector<1x32xf32>
    %104 = arith.subf %98, %103 : vector<1x32xf32>
    %cst_28 = arith.constant dense<0.000000e+00> : vector<1x192xf32>
    %105 = tpu.matmul %102, %88, %cst_28 {dimension_numbers = #tpu.dot_dimension_numbers<[1], [0], [0], [1], [0, 0, 1, 1], [], []>} : vector<1x32xf32>, vector<32x192xf32>, vector<1x192xf32> -> vector<1x192xf32>
    %cst_29 = arith.constant dense<0.000000e+00> : vector<1x192xf32>
    %106 = tpu.matmul %104, %88, %cst_29 {dimension_numbers = #tpu.dot_dimension_numbers<[1], [0], [0], [1], [0, 0, 1, 1], [], []>} : vector<1x32xf32>, vector<32x192xf32>, vector<1x192xf32> -> vector<1x192xf32>
    %107 = vector.broadcast %105 : vector<1x192xf32> to vector<12x192xf32>
    %108 = arith.mulf %71, %107 : vector<12x192xf32>
    %109 = vector.broadcast %106 : vector<1x192xf32> to vector<12x192xf32>
    %110 = arith.addf %108, %109 : vector<12x192xf32>
    %cst_30 = arith.constant 0.000000e+00 : f32
    %111 = vector.broadcast %cst_30 : f32 to vector<12x192xf32>
    %112 = arith.maximumf %110, %111 : vector<12x192xf32>
    %113 = vector.extract_strided_slice %112 {offsets = [0, 0], sizes = [6, 192], strides = [1, 1]} : vector<12x192xf32> to vector<6x192xf32>
    %cst_31 = arith.constant dense<0.000000e+00> : vector<192xf32>
    %114 = vector.multi_reduction <add>, %113, %cst_31 [0] : vector<6x192xf32> to vector<192xf32>
    %115 = vector.shape_cast %114 : vector<192xf32> to vector<1x192xf32>
    %116 = vector.extract_strided_slice %112 {offsets = [6, 0], sizes = [6, 192], strides = [1, 1]} : vector<12x192xf32> to vector<6x192xf32>
    %cst_32 = arith.constant dense<0.000000e+00> : vector<192xf32>
    %117 = vector.multi_reduction <add>, %116, %cst_32 [0] : vector<6x192xf32> to vector<192xf32>
    %118 = vector.shape_cast %117 : vector<192xf32> to vector<1x192xf32>
    %119 = tpu.concatenate %115, %118 in 0 : vector<1x192xf32>, vector<1x192xf32> -> vector<2x192xf32>
    %cst_33 = arith.constant dense<0.000000e+00> : vector<2x32xf32>
    %120 = tpu.matmul %119, %82, %cst_33 {dimension_numbers = #tpu.dot_dimension_numbers<[1], [0], [0], [1], [0, 0, 1, 1], [], []>} : vector<2x192xf32>, vector<192x32xf32>, vector<2x32xf32> -> vector<2x32xf32>
    %cst_34 = arith.constant 0.027777778 : f32
    %121 = vector.broadcast %cst_34 : f32 to vector<2x32xf32>
    %122 = arith.mulf %120, %121 : vector<2x32xf32>
    %c8 = arith.constant 8 : index
    %c0_35 = arith.constant 0 : index
    %123 = vector.load %arg2[%c8, %c0_35] : memref<80x32xf32, #tpu.memory_space<vmem>>, vector<32x32xf32>
    %c40 = arith.constant 40 : index
    %c0_36 = arith.constant 0 : index
    %124 = vector.load %arg2[%c40, %c0_36] : memref<80x32xf32, #tpu.memory_space<vmem>>, vector<32x3xf32>
    %c72 = arith.constant 72 : index
    %c0_37 = arith.constant 0 : index
    %125 = vector.load %arg2[%c72, %c0_37] : memref<80x32xf32, #tpu.memory_space<vmem>>, vector<3x3xf32>
    %c4 = arith.constant 4 : index
    %c0_38 = arith.constant 0 : index
    %126 = vector.load %arg2[%c4, %c0_38] : memref<80x32xf32, #tpu.memory_space<vmem>>, vector<1x32xf32>
    %c5 = arith.constant 5 : index
    %c0_39 = arith.constant 0 : index
    %127 = vector.load %arg2[%c5, %c0_39] : memref<80x32xf32, #tpu.memory_space<vmem>>, vector<1x3xf32>
    %c6 = arith.constant 6 : index
    %c0_40 = arith.constant 0 : index
    %128 = vector.load %arg2[%c6, %c0_40] : memref<80x32xf32, #tpu.memory_space<vmem>>, vector<1x3xf32>
    %cst_41 = arith.constant dense<0.000000e+00> : vector<2x32xf32>
    %129 = tpu.matmul %122, %123, %cst_41 {dimension_numbers = #tpu.dot_dimension_numbers<[1], [0], [0], [1], [0, 0, 1, 1], [], []>} : vector<2x32xf32>, vector<32x32xf32>, vector<2x32xf32> -> vector<2x32xf32>
    %130 = vector.broadcast %126 : vector<1x32xf32> to vector<2x32xf32>
    %131 = arith.addf %129, %130 : vector<2x32xf32>
    %cst_42 = arith.constant 0.000000e+00 : f32
    %132 = vector.broadcast %cst_42 : f32 to vector<2x32xf32>
    %133 = arith.subf %132, %131 : vector<2x32xf32>
    %134 = math.exp %133 : vector<2x32xf32>
    %cst_43 = arith.constant 1.000000e+00 : f32
    %135 = vector.broadcast %cst_43 : f32 to vector<2x32xf32>
    %136 = arith.addf %135, %134 : vector<2x32xf32>
    %137 = tpu.reciprocal %136 {approx = true} : vector<2x32xf32> -> vector<2x32xf32>
    %138 = arith.mulf %122, %137 : vector<2x32xf32>
    %cst_44 = arith.constant dense<0.000000e+00> : vector<2x3xf32>
    %139 = tpu.matmul %138, %124, %cst_44 {dimension_numbers = #tpu.dot_dimension_numbers<[1], [0], [0], [1], [0, 0, 1, 1], [], []>} : vector<2x32xf32>, vector<32x3xf32>, vector<2x3xf32> -> vector<2x3xf32>
    %140 = vector.broadcast %127 : vector<1x3xf32> to vector<2x3xf32>
    %141 = arith.addf %139, %140 : vector<2x3xf32>
    %cst_45 = arith.constant dense<0.000000e+00> : vector<2x3xf32>
    %142 = tpu.matmul %141, %125, %cst_45 {dimension_numbers = #tpu.dot_dimension_numbers<[1], [0], [0], [1], [0, 0, 1, 1], [], []>} : vector<2x3xf32>, vector<3x3xf32>, vector<2x3xf32> -> vector<2x3xf32>
    %143 = vector.broadcast %128 : vector<1x3xf32> to vector<2x3xf32>
    %144 = arith.addf %142, %143 : vector<2x3xf32>
    %cst_46 = arith.constant 0.000000e+00 : f32
    %145 = vector.broadcast %cst_46 : f32 to vector<2x3xf32>
    %146 = arith.subf %145, %144 : vector<2x3xf32>
    %147 = math.exp %146 : vector<2x3xf32>
    %cst_47 = arith.constant 1.000000e+00 : f32
    %148 = vector.broadcast %cst_47 : f32 to vector<2x3xf32>
    %149 = arith.addf %148, %147 : vector<2x3xf32>
    %150 = tpu.reciprocal %149 {approx = true} : vector<2x3xf32> -> vector<2x3xf32>
    %151 = arith.mulf %141, %150 : vector<2x3xf32>
    %cst_48 = arith.constant dense<0xFF800000> : vector<2xf32>
    %152 = vector.multi_reduction <maximumf>, %151, %cst_48 [1] : vector<2x3xf32> to vector<2xf32>
    %153 = vector.shape_cast %152 : vector<2xf32> to vector<2x1xf32>
    %154 = vector.broadcast %153 : vector<2x1xf32> to vector<2x3xf32>
    %155 = arith.subf %151, %154 : vector<2x3xf32>
    %156 = math.exp %155 : vector<2x3xf32>
    %cst_49 = arith.constant dense<0.000000e+00> : vector<2xf32>
    %157 = vector.multi_reduction <add>, %156, %cst_49 [1] : vector<2x3xf32> to vector<2xf32>
    %158 = vector.shape_cast %157 : vector<2xf32> to vector<2x1xf32>
    %159 = tpu.reciprocal %158 {approx = true} : vector<2x1xf32> -> vector<2x1xf32>
    %160 = vector.broadcast %159 : vector<2x1xf32> to vector<2x3xf32>
    %161 = arith.mulf %156, %160 : vector<2x3xf32>
    %c0_50 = arith.constant 0 : index
    %c0_51 = arith.constant 0 : index
    %162 = vector.load %arg4[%c0_50, %c0_51] : memref<2x3xf32, #tpu.memory_space<vmem>>, vector<2x3xf32>
    tpu.vector_store %arg4[%c0_50, %c0_51], %161 {strides = array<i32>} : memref<2x3xf32, #tpu.memory_space<vmem>>, vector<2x3xf32>,
    return
  }
}

</mosaic_0001>

<llo_original>
// kernel: gate_pallas.1
$region0: #{gate_pallas.1}
  #allocation0 [shape = 'u32[]', space=smem, size = 0x4, offset = 0x4, fixed_abs, tag = 'smem constant byte address 0x4 - core index']
  #allocation1 [shape = 'u32[144,128]{1,0:T(1,128)}', space=vmem, size = 0x12000, scoped, tag = 'internal scratch']
  #allocation2 [shape = 'bf16[1024,192]{1,0:T(8,128)(2,1)}', space=vmem, size = 0x80000, scoped, tag = 'scratch operand']
  #allocation3 [shape = 's32[1]{0}', space=sflag, size = 0x4, scoped, tag = 'scratch operand']
  #allocation6 [shape = 's32[]', space=sflag, size = 0x4, offset = 0, fixed_abs, tag = 'sflag constant byte address 0x0 - dummy sync flag']
  %s0 = inlined_call_operand.vmem [shape: bf16[26,256], index: 0, kind: input, shape index: {}]
  %s1 = inlined_call_operand.vmem [shape: bf16[256,128], index: 1, kind: input, shape index: {}]
  %s2 = inlined_call_operand.vmem [shape: f32[80,32], index: 2, kind: input, shape index: {}]
  %s3 = inlined_call_operand.vmem [shape: bf16[1024,192], index: 3, kind: input, shape index: {}]
  %s4 = inlined_call_operand.hbm [shape: f32[2,3], index: 4, kind: output, shape index: {}]
  %s5 = sld [smem:[#allocation0]]
  $region56: #{gate_pallas.1} parent=0
    _
  %s7 = ssub.s32 1, %s5
  %s8 = scalar_select 0, %s7, %s5
  $region1: #{gate_pallas.1} parent=0
    #allocation4 [shape = 'u8[1024]{0}', space=vmem, size = 0x400, scoped, tag = 'output window, operand 0, single buffered']
    #allocation5 [shape = 's32[1]{0}', space=sflag, size = 0x4, scoped, tag = 'scoped memory for gate_pallas.1']
    %9 = vsyncpa [#allocation5], 0
    // Predicated region
    $region2: #{gate_pallas.1} parent=1 // pred_check
      _
    $region3: #{gate_pallas.1} parent=1 // pred_check_branch
      %11 = sbr.rel (0) target = $region5
    $region4: #{gate_pallas.1} parent=1 // pred_region
      _
    $region5: #{gate_pallas.1} parent=1 // pred_fallthru
      _
    // Predicated region
    $region6: #{gate_pallas.1} parent=1 // pred_check
      _
    $region7: #{gate_pallas.1} parent=1 // pred_check_branch
      %13 = sbr.rel (0) target = $region9
    $region8: #{gate_pallas.1} parent=1 // pred_region
      _
    $region9: #{gate_pallas.1} parent=1 // pred_fallthru
      _
    // Predicated region
    $region10: #{gate_pallas.1} parent=1 // pred_check
      _
    $region11: #{gate_pallas.1} parent=1 // pred_check_branch
      %15 = sbr.rel (0) target = $region13
    $region12: #{gate_pallas.1} parent=1 // pred_region
      _
    $region13: #{gate_pallas.1} parent=1 // pred_fallthru
      _
    %p18 = scmp.lt.u32.totalorder 1024, 8
    %p19 = pneg %p18
    // Predicated region
    $region14: #{gate_pallas.1} parent=1 // pred_check
      _
    $region15: #{gate_pallas.1} parent=1 // pred_check_branch
      %21 = sbr.rel (%p18) target = $region17
    $region16: #{gate_pallas.1} parent=1 // pred_region
      %s37 = sand.u32 1024, 7
      %p38 = scmp.eq.s32.totalorder %s37, 0
      // Predicated region
      $region29: #{gate_pallas.1} parent=16 // pred_check
        %p39 = pneg %p38
      $region30: #{gate_pallas.1} parent=16 // pred_check_branch
        %41 = sbr.rel (%p39) target = $region32
      $region31: #{gate_pallas.1} parent=16 // pred_region
        loop: start=0, step=1, limit=1
        $region33: #{gate_pallas.1} parent=31 // loop_pre_header
          _
        $region34: #{gate_pallas.1} parent=31 // loop_header
          %s43 = sphi 0, %s47
          %p44 = scmp.ge.s32.totalorder %s43, 1
          %s48 = sphi %s3, %s3
          %s49 = sphi [#allocation2], [#allocation2]
        $region35: #{gate_pallas.1} parent=31 // loop_header_branch
          %46 = sbr.rel (%p44) target = $region39
        $region36: #{gate_pallas.1} parent=31 // loop_body
          %v50 = vld [vmem:[%s48] sm:$0xff]
          %51 = vst [vmem:[%s49] sm:$0xff] %v50
          %v52 = vld [vmem:[%s48 + $0x8] sm:$0xff]
          %53 = vst [vmem:[%s49 + $0x8] sm:$0xff] %v52
          %v54 = vld [vmem:[%s48 + $0x10] sm:$0xff]
          %55 = vst [vmem:[%s49 + $0x10] sm:$0xff] %v54
          %v56 = vld [vmem:[%s48 + $0x18] sm:$0xff]
          %57 = vst [vmem:[%s49 + $0x18] sm:$0xff] %v56
          %v58 = vld [vmem:[%s48 + $0x20] sm:$0xff]
          %59 = vst [vmem:[%s49 + $0x20] sm:$0xff] %v58
          %v60 = vld [vmem:[%s48 + $0x28] sm:$0xff]
          %61 = vst [vmem:[%s49 + $0x28] sm:$0xff] %v60
          %v62 = vld [vmem:[%s48 + $0x30] sm:$0xff]
          %63 = vst [vmem:[%s49 + $0x30] sm:$0xff] %v62
          %v64 = vld [vmem:[%s48 + $0x38] sm:$0xff]
          %65 = vst [vmem:[%s49 + $0x38] sm:$0xff] %v64
          %v66 = vld [vmem:[%s48 + $0x40] sm:$0xff]
          %67 = vst [vmem:[%s49 + $0x40] sm:$0xff] %v66
          %v68 = vld [vmem:[%s48 + $0x48] sm:$0xff]
          %69 = vst [vmem:[%s49 + $0x48] sm:$0xff] %v68
          %v70 = vld [vmem:[%s48 + $0x50] sm:$0xff]
          %71 = vst [vmem:[%s49 + $0x50] sm:$0xff] %v70
          %v72 = vld [vmem:[%s48 + $0x58] sm:$0xff]
          %73 = vst [vmem:[%s49 + $0x58] sm:$0xff] %v72
          %v74 = vld [vmem:[%s48 + $0x60] sm:$0xff]
          %75 = vst [vmem:[%s49 + $0x60] sm:$0xff] %v74
          %v76 = vld [vmem:[%s48 + $0x68] sm:$0xff]
          %77 = vst [vmem:[%s49 + $0x68] sm:$0xff] %v76
          %v78 = vld [vmem:[%s48 + $0x70] sm:$0xff]
          %79 = vst [vmem:[%s49 + $0x70] sm:$0xff] %v78
          %v80 = vld [vmem:[%s48 + $0x78] sm:$0xff]
          %81 = vst [vmem:[%s49 + $0x78] sm:$0xff] %v80
          %v82 = vld [vmem:[%s48 + $0x80] sm:$0xff]
          %83 = vst [vmem:[%s49 + $0x80] sm:$0xff] %v82
          %v84 = vld [vmem:[%s48 + $0x88] sm:$0xff]
          %85 = vst [vmem:[%s49 + $0x88] sm:$0xff] %v84
          %v86 = vld [vmem:[%s48 + $0x90] sm:$0xff]
          %87 = vst [vmem:[%s49 + $0x90] sm:$0xff] %v86
          %v88 = vld [vmem:[%s48 + $0x98] sm:$0xff]
          %89 = vst [vmem:[%s49 + $0x98] sm:$0xff] %v88
          %v90 = vld [vmem:[%s48 + $0xa0] sm:$0xff]
          %91 = vst [vmem:[%s49 + $0xa0] sm:$0xff] %v90
          %v92 = vld [vmem:[%s48 + $0xa8] sm:$0xff]
          %93 = vst [vmem:[%s49 + $0xa8] sm:$0xff] %v92
          %v94 = vld [vmem:[%s48 + $0xb0] sm:$0xff]
          %95 = vst [vmem:[%s49 + $0xb0] sm:$0xff] %v94
          %v96 = vld [vmem:[%s48 + $0xb8] sm:$0xff]
          %97 = vst [vmem:[%s49 + $0xb8] sm:$0xff] %v96
          %v98 = vld [vmem:[%s48 + $0xc0] sm:$0xff]
          %99 = vst [vmem:[%s49 + $0xc0] sm:$0xff] %v98
          %v100 = vld [vmem:[%s48 + $0xc8] sm:$0xff]
          %101 = vst [vmem:[%s49 + $0xc8] sm:$0xff] %v100
          %v102 = vld [vmem:[%s48 + $0xd0] sm:$0xff]
          %103 = vst [vmem:[%s49 + $0xd0] sm:$0xff] %v102
          %v104 = vld [vmem:[%s48 + $0xd8] sm:$0xff]
          %105 = vst [vmem:[%s49 + $0xd8] sm:$0xff] %v104
          %v106 = vld [vmem:[%s48 + $0xe0] sm:$0xff]
          %107 = vst [vmem:[%s49 + $0xe0] sm:$0xff] %v106
          %v108 = vld [vmem:[%s48 + $0xe8] sm:$0xff]
          %109 = vst [vmem:[%s49 + $0xe8] sm:$0xff] %v108
          %v110 = vld [vmem:[%s48 + $0xf0] sm:$0xff]
          %111 = vst [vmem:[%s49 + $0xf0] sm:$0xff] %v110
          %v112 = vld [vmem:[%s48 + $0xf8] sm:$0xff]
          %113 = vst [vmem:[%s49 + $0xf8] sm:$0xff] %v112
          %v114 = vld [vmem:[%s48 + $0x100] sm:$0xff]
          %115 = vst [vmem:[%s49 + $0x100] sm:$0xff] %v114
          %v116 = vld [vmem:[%s48 + $0x108] sm:$0xff]
          %117 = vst [vmem:[%s49 + $0x108] sm:$0xff] %v116
          %v118 = vld [vmem:[%s48 + $0x110] sm:$0xff]
          %119 = vst [vmem:[%s49 + $0x110] sm:$0xff] %v118
          %v120 = vld [vmem:[%s48 + $0x118] sm:$0xff]
          %121 = vst [vmem:[%s49 + $0x118] sm:$0xff] %v120
          %v122 = vld [vmem:[%s48 + $0x120] sm:$0xff]
          %123 = vst [vmem:[%s49 + $0x120] sm:$0xff] %v122
          %v124 = vld [vmem:[%s48 + $0x128] sm:$0xff]
          %125 = vst [vmem:[%s49 + $0x128] sm:$0xff] %v124
          %v126 = vld [vmem:[%s48 + $0x130] sm:$0xff]
          %127 = vst [vmem:[%s49 + $0x130] sm:$0xff] %v126
          %v128 = vld [vmem:[%s48 + $0x138] sm:$0xff]
          %129 = vst [vmem:[%s49 + $0x138] sm:$0xff] %v128
          %v130 = vld [vmem:[%s48 + $0x140] sm:$0xff]
          %131 = vst [vmem:[%s49 + $0x140] sm:$0xff] %v130
          %v132 = vld [vmem:[%s48 + $0x148] sm:$0xff]
          %133 = vst [vmem:[%s49 + $0x148] sm:$0xff] %v132
          %v134 = vld [vmem:[%s48 + $0x150] sm:$0xff]
          %135 = vst [vmem:[%s49 + $0x150] sm:$0xff] %v134
          %v136 = vld [vmem:[%s48 + $0x158] sm:$0xff]
          %137 = vst [vmem:[%s49 + $0x158] sm:$0xff] %v136
          %v138 = vld [vmem:[%s48 + $0x160] sm:$0xff]
          %139 = vst [vmem:[%s49 + $0x160] sm:$0xff] %v138
          %v140 = vld [vmem:[%s48 + $0x168] sm:$0xff]
          %141 = vst [vmem:[%s49 + $0x168] sm:$0xff] %v140
          %v142 = vld [vmem:[%s48 + $0x170] sm:$0xff]
          %143 = vst [vmem:[%s49 + $0x170] sm:$0xff] %v142
          %v144 = vld [vmem:[%s48 + $0x178] sm:$0xff]
          %145 = vst [vmem:[%s49 + $0x178] sm:$0xff] %v144
          %v146 = vld [vmem:[%s48 + $0x180] sm:$0xff]
          %147 = vst [vmem:[%s49 + $0x180] sm:$0xff] %v146
          %v148 = vld [vmem:[%s48 + $0x188] sm:$0xff]
          %149 = vst [vmem:[%s49 + $0x188] sm:$0xff] %v148
          %v150 = vld [vmem:[%s48 + $0x190] sm:$0xff]
          %151 = vst [vmem:[%s49 + $0x190] sm:$0xff] %v150
          %v152 = vld [vmem:[%s48 + $0x198] sm:$0xff]
          %153 = vst [vmem:[%s49 + $0x198] sm:$0xff] %v152
          %v154 = vld [vmem:[%s48 + $0x1a0] sm:$0xff]
          %155 = vst [vmem:[%s49 + $0x1a0] sm:$0xff] %v154
          %v156 = vld [vmem:[%s48 + $0x1a8] sm:$0xff]
          %157 = vst [vmem:[%s49 + $0x1a8] sm:$0xff] %v156
          %v158 = vld [vmem:[%s48 + $0x1b0] sm:$0xff]
          %159 = vst [vmem:[%s49 + $0x1b0] sm:$0xff] %v158
          %v160 = vld [vmem:[%s48 + $0x1b8] sm:$0xff]
          %161 = vst [vmem:[%s49 + $0x1b8] sm:$0xff] %v160
          %v162 = vld [vmem:[%s48 + $0x1c0] sm:$0xff]
          %163 = vst [vmem:[%s49 + $0x1c0] sm:$0xff] %v162
          %v164 = vld [vmem:[%s48 + $0x1c8] sm:$0xff]
          %165 = vst [vmem:[%s49 + $0x1c8] sm:$0xff] %v164
          %v166 = vld [vmem:[%s48 + $0x1d0] sm:$0xff]
          %167 = vst [vmem:[%s49 + $0x1d0] sm:$0xff] %v166
          %v168 = vld [vmem:[%s48 + $0x1d8] sm:$0xff]
          %169 = vst [vmem:[%s49 + $0x1d8] sm:$0xff] %v168
          %v170 = vld [vmem:[%s48 + $0x1e0] sm:$0xff]
          %171 = vst [vmem:[%s49 + $0x1e0] sm:$0xff] %v170
          %v172 = vld [vmem:[%s48 + $0x1e8] sm:$0xff]
          %173 = vst [vmem:[%s49 + $0x1e8] sm:$0xff] %v172
          %v174 = vld [vmem:[%s48 + $0x1f0] sm:$0xff]
          %175 = vst [vmem:[%s49 + $0x1f0] sm:$0xff] %v174
          %v176 = vld [vmem:[%s48 + $0x1f8] sm:$0xff]
          %177 = vst [vmem:[%s49 + $0x1f8] sm:$0xff] %v176
          %v178 = vld [vmem:[%s48 + $0x200] sm:$0xff]
          %179 = vst [vmem:[%s49 + $0x200] sm:$0xff] %v178
          %v180 = vld [vmem:[%s48 + $0x208] sm:$0xff]
          %181 = vst [vmem:[%s49 + $0x208] sm:$0xff] %v180
          %v182 = vld [vmem:[%s48 + $0x210] sm:$0xff]
          %183 = vst [vmem:[%s49 + $0x210] sm:$0xff] %v182
          %v184 = vld [vmem:[%s48 + $0x218] sm:$0xff]
          %185 = vst [vmem:[%s49 + $0x218] sm:$0xff] %v184
          %v186 = vld [vmem:[%s48 + $0x220] sm:$0xff]
          %187 = vst [vmem:[%s49 + $0x220] sm:$0xff] %v186
          %v188 = vld [vmem:[%s48 + $0x228] sm:$0xff]
          %189 = vst [vmem:[%s49 + $0x228] sm:$0xff] %v188
          %v190 = vld [vmem:[%s48 + $0x230] sm:$0xff]
          %191 = vst [vmem:[%s49 + $0x230] sm:$0xff] %v190
          %v192 = vld [vmem:[%s48 + $0x238] sm:$0xff]
          %193 = vst [vmem:[%s49 + $0x238] sm:$0xff] %v192
          %v194 = vld [vmem:[%s48 + $0x240] sm:$0xff]
          %195 = vst [vmem:[%s49 + $0x240] sm:$0xff] %v194
          %v196 = vld [vmem:[%s48 + $0x248] sm:$0xff]
          %197 = vst [vmem:[%s49 + $0x248] sm:$0xff] %v196
          %v198 = vld [vmem:[%s48 + $0x250] sm:$0xff]
          %199 = vst [vmem:[%s49 + $0x250] sm:$0xff] %v198
          %v200 = vld [vmem:[%s48 + $0x258] sm:$0xff]
          %201 = vst [vmem:[%s49 + $0x258] sm:$0xff] %v200
          %v202 = vld [vmem:[%s48 + $0x260] sm:$0xff]
          %203 = vst [vmem:[%s49 + $0x260] sm:$0xff] %v202
          %v204 = vld [vmem:[%s48 + $0x268] sm:$0xff]
          %205 = vst [vmem:[%s49 + $0x268] sm:$0xff] %v204
          %v206 = vld [vmem:[%s48 + $0x270] sm:$0xff]
          %207 = vst [vmem:[%s49 + $0x270] sm:$0xff] %v206
          %v208 = vld [vmem:[%s48 + $0x278] sm:$0xff]
          %209 = vst [vmem:[%s49 + $0x278] sm:$0xff] %v208
          %v210 = vld [vmem:[%s48 + $0x280] sm:$0xff]
          %211 = vst [vmem:[%s49 + $0x280] sm:$0xff] %v210
          %v212 = vld [vmem:[%s48 + $0x288] sm:$0xff]
          %213 = vst [vmem:[%s49 + $0x288] sm:$0xff] %v212
          %v214 = vld [vmem:[%s48 + $0x290] sm:$0xff]
          %215 = vst [vmem:[%s49 + $0x290] sm:$0xff] %v214
          %v216 = vld [vmem:[%s48 + $0x298] sm:$0xff]
          %217 = vst [vmem:[%s49 + $0x298] sm:$0xff] %v216
          %v218 = vld [vmem:[%s48 + $0x2a0] sm:$0xff]
          %219 = vst [vmem:[%s49 + $0x2a0] sm:$0xff] %v218
          %v220 = vld [vmem:[%s48 + $0x2a8] sm:$0xff]
          %221 = vst [vmem:[%s49 + $0x2a8] sm:$0xff] %v220
          %v222 = vld [vmem:[%s48 + $0x2b0] sm:$0xff]
          %223 = vst [vmem:[%s49 + $0x2b0] sm:$0xff] %v222
          %v224 = vld [vmem:[%s48 + $0x2b8] sm:$0xff]
          %225 = vst [vmem:[%s49 + $0x2b8] sm:$0xff] %v224
          %v226 = vld [vmem:[%s48 + $0x2c0] sm:$0xff]
          %227 = vst [vmem:[%s49 + $0x2c0] sm:$0xff] %v226
          %v228 = vld [vmem:[%s48 + $0x2c8] sm:$0xff]
          %229 = vst [vmem:[%s49 + $0x2c8] sm:$0xff] %v228
          %v230 = vld [vmem:[%s48 + $0x2d0] sm:$0xff]
          %231 = vst [vmem:[%s49 + $0x2d0] sm:$0xff] %v230
          %v232 = vld [vmem:[%s48 + $0x2d8] sm:$0xff]
          %233 = vst [vmem:[%s49 + $0x2d8] sm:$0xff] %v232
          %v234 = vld [vmem:[%s48 + $0x2e0] sm:$0xff]
          %235 = vst [vmem:[%s49 + $0x2e0] sm:$0xff] %v234
          %v236 = vld [vmem:[%s48 + $0x2e8] sm:$0xff]
          %237 = vst [vmem:[%s49 + $0x2e8] sm:$0xff] %v236
          %v238 = vld [vmem:[%s48 + $0x2f0] sm:$0xff]
          %239 = vst [vmem:[%s49 + $0x2f0] sm:$0xff] %v238
          %v240 = vld [vmem:[%s48 + $0x2f8] sm:$0xff]
          %241 = vst [vmem:[%s49 + $0x2f8] sm:$0xff] %v240
          %v242 = vld [vmem:[%s48 + $0x300] sm:$0xff]
          %243 = vst [vmem:[%s49 + $0x300] sm:$0xff] %v242
          %v244 = vld [vmem:[%s48 + $0x308] sm:$0xff]
          %245 = vst [vmem:[%s49 + $0x308] sm:$0xff] %v244
          %v246 = vld [vmem:[%s48 + $0x310] sm:$0xff]
          %247 = vst [vmem:[%s49 + $0x310] sm:$0xff] %v246
          %v248 = vld [vmem:[%s48 + $0x318] sm:$0xff]
          %249 = vst [vmem:[%s49 + $0x318] sm:$0xff] %v248
          %v250 = vld [vmem:[%s48 + $0x320] sm:$0xff]
          %251 = vst [vmem:[%s49 + $0x320] sm:$0xff] %v250
          %v252 = vld [vmem:[%s48 + $0x328] sm:$0xff]
          %253 = vst [vmem:[%s49 + $0x328] sm:$0xff] %v252
          %v254 = vld [vmem:[%s48 + $0x330] sm:$0xff]
          %255 = vst [vmem:[%s49 + $0x330] sm:$0xff] %v254
          %v256 = vld [vmem:[%s48 + $0x338] sm:$0xff]
          %257 = vst [vmem:[%s49 + $0x338] sm:$0xff] %v256
          %v258 = vld [vmem:[%s48 + $0x340] sm:$0xff]
          %259 = vst [vmem:[%s49 + $0x340] sm:$0xff] %v258
          %v260 = vld [vmem:[%s48 + $0x348] sm:$0xff]
          %261 = vst [vmem:[%s49 + $0x348] sm:$0xff] %v260
          %v262 = vld [vmem:[%s48 + $0x350] sm:$0xff]
          %263 = vst [vmem:[%s49 + $0x350] sm:$0xff] %v262
          %v264 = vld [vmem:[%s48 + $0x358] sm:$0xff]
          %265 = vst [vmem:[%s49 + $0x358] sm:$0xff] %v264
          %v266 = vld [vmem:[%s48 + $0x360] sm:$0xff]
          %267 = vst [vmem:[%s49 + $0x360] sm:$0xff] %v266
          %v268 = vld [vmem:[%s48 + $0x368] sm:$0xff]
          %269 = vst [vmem:[%s49 + $0x368] sm:$0xff] %v268
          %v270 = vld [vmem:[%s48 + $0x370] sm:$0xff]
          %271 = vst [vmem:[%s49 + $0x370] sm:$0xff] %v270
          %v272 = vld [vmem:[%s48 + $0x378] sm:$0xff]
          %273 = vst [vmem:[%s49 + $0x378] sm:$0xff] %v272
          %v274 = vld [vmem:[%s48 + $0x380] sm:$0xff]
          %275 = vst [vmem:[%s49 + $0x380] sm:$0xff] %v274
          %v276 = vld [vmem:[%s48 + $0x388] sm:$0xff]
          %277 = vst [vmem:[%s49 + $0x388] sm:$0xff] %v276
          %v278 = vld [vmem:[%s48 + $0x390] sm:$0xff]
          %279 = vst [vmem:[%s49 + $0x390] sm:$0xff] %v278
          %v280 = vld [vmem:[%s48 + $0x398] sm:$0xff]
          %281 = vst [vmem:[%s49 + $0x398] sm:$0xff] %v280
          %v282 = vld [vmem:[%s48 + $0x3a0] sm:$0xff]
          %283 = vst [vmem:[%s49 + $0x3a0] sm:$0xff] %v282
          %v284 = vld [vmem:[%s48 + $0x3a8] sm:$0xff]
          %285 = vst [vmem:[%s49 + $0x3a8] sm:$0xff] %v284
          %v286 = vld [vmem:[%s48 + $0x3b0] sm:$0xff]
          %287 = vst [vmem:[%s49 + $0x3b0] sm:$0xff] %v286
          %v288 = vld [vmem:[%s48 + $0x3b8] sm:$0xff]
          %289 = vst [vmem:[%s49 + $0x3b8] sm:$0xff] %v288
          %v290 = vld [vmem:[%s48 + $0x3c0] sm:$0xff]
          %291 = vst [vmem:[%s49 + $0x3c0] sm:$0xff] %v290
          %v292 = vld [vmem:[%s48 + $0x3c8] sm:$0xff]
          %293 = vst [vmem:[%s49 + $0x3c8] sm:$0xff] %v292
          %v294 = vld [vmem:[%s48 + $0x3d0] sm:$0xff]
          %295 = vst [vmem:[%s49 + $0x3d0] sm:$0xff] %v294
          %v296 = vld [vmem:[%s48 + $0x3d8] sm:$0xff]
          %297 = vst [vmem:[%s49 + $0x3d8] sm:$0xff] %v296
          %v298 = vld [vmem:[%s48 + $0x3e0] sm:$0xff]
          %299 = vst [vmem:[%s49 + $0x3e0] sm:$0xff] %v298
          %v300 = vld [vmem:[%s48 + $0x3e8] sm:$0xff]
          %301 = vst [vmem:[%s49 + $0x3e8] sm:$0xff] %v300
          %v302 = vld [vmem:[%s48 + $0x3f0] sm:$0xff]
          %303 = vst [vmem:[%s49 + $0x3f0] sm:$0xff] %v302
          %v304 = vld [vmem:[%s48 + $0x3f8] sm:$0xff]
          %305 = vst [vmem:[%s49 + $0x3f8] sm:$0xff] %v304
        $region37: #{gate_pallas.1} parent=31 // loop_footer
          %s47 = sadd.s32 1, %s43
        $region38: #{gate_pallas.1} parent=31 // loop_footer_branch
          %42 = sbr.rel target = $region34
        $region39: #{gate_pallas.1} parent=31 // loop_exit
          _
      $region32: #{gate_pallas.1} parent=16 // pred_fallthru
        _
      %p306 = pneg %p38
      // Predicated region
      $region40: #{gate_pallas.1} parent=16 // pred_check
        _
      $region41: #{gate_pallas.1} parent=16 // pred_check_branch
        %308 = sbr.rel (%p38) target = $region43
      $region42: #{gate_pallas.1} parent=16 // pred_region
        %s309 = sand.u32 1024, 7
      $region43: #{gate_pallas.1} parent=16 // pred_fallthru
        _
    $region17: #{gate_pallas.1} parent=1 // pred_fallthru
      _
    // Predicated region
    $region18: #{gate_pallas.1} parent=1 // pred_check
      %p22 = pneg %p18
    $region19: #{gate_pallas.1} parent=1 // pred_check_branch
      %24 = sbr.rel (%p22) target = $region21
    $region20: #{gate_pallas.1} parent=1 // pred_region
      %s25 = sshll.u32 1, 1024
      %s26 = ssub.s32 %s25, 1
      loop: start=0, step=1, limit=1
      $region22: #{gate_pallas.1} parent=20 // loop_pre_header
        _
      $region23: #{gate_pallas.1} parent=20 // loop_header
        %s28 = sphi 0, %s32
        %p29 = scmp.ge.s32.totalorder %s28, 1
        %s33 = sphi %s3, %s3
        %s34 = sphi [#allocation2], [#allocation2]
      $region24: #{gate_pallas.1} parent=20 // loop_header_branch
        %31 = sbr.rel (%p29) target = $region28
      $region25: #{gate_pallas.1} parent=20 // loop_body
        %v35 = vld [vmem:[%s33] sm:%s26]
        %36 = vst [vmem:[%s34] sm:%s26] %v35
      $region26: #{gate_pallas.1} parent=20 // loop_footer
        %s32 = sadd.s32 1, %s28
      $region27: #{gate_pallas.1} parent=20 // loop_footer_branch
        %27 = sbr.rel target = $region23
      $region28: #{gate_pallas.1} parent=20 // loop_exit
        _
    $region21: #{gate_pallas.1} parent=1 // pred_fallthru
      _
    // Predicated region
    $region44: #{gate_pallas.1} parent=1 // pred_check
      _
    $region45: #{gate_pallas.1} parent=1 // pred_check_branch
      %312 = sbr.rel (0) target = $region47
    $region46: #{gate_pallas.1} parent=1 // pred_region
      %313 = vsyncadd [#allocation3], 16384
    $region47: #{gate_pallas.1} parent=1 // pred_fallthru
      _
    %v314 = vld [vmem:[%s0] sm:$0xff]
    %v315 = vld [vmem:[%s0 + $0x8] sm:$0xff]
    %v316 = vld [vmem:[%s0 + $0x10] sm:$0xff]
    %v317 = vld [vmem:[%s0 + $0x18] sm:$0x11]
    %v318 = vld [vmem:[%s1] sm:$0xf]
    %v319 = vld [vmem:[%s1 + $0x4] sm:$0xf]
    %v320 = vld [vmem:[%s1 + $0x8] sm:$0xf]
    %v321 = vld [vmem:[%s1 + $0xc] sm:$0xf]
    %v322 = vld [vmem:[%s1 + $0x10] sm:$0xf]
    %v323 = vld [vmem:[%s1 + $0x14] sm:$0xf]
    %v324 = vld [vmem:[%s1 + $0x18] sm:$0xf]
    %v325 = vld [vmem:[%s1 + $0x1c] sm:$0xf]
    %v326 = vld [vmem:[%s1 + $0x20] sm:$0xf]
    %v327 = vld [vmem:[%s1 + $0x24] sm:$0xf]
    %v328 = vld [vmem:[%s1 + $0x28] sm:$0xf]
    %v329 = vld [vmem:[%s1 + $0x2c] sm:$0xf]
    %v330 = vld [vmem:[%s1 + $0x30] sm:$0xf]
    %v331 = vld [vmem:[%s1 + $0x34] sm:$0xf]
    %v332 = vld [vmem:[%s1 + $0x38] sm:$0xf]
    %v333 = vld [vmem:[%s1 + $0x3c] sm:$0xf]
    %v334 = vld [vmem:[%s1 + $0x40] sm:$0xf]
    %v335 = vld [vmem:[%s1 + $0x44] sm:$0xf]
    %v336 = vld [vmem:[%s1 + $0x48] sm:$0xf]
    %v337 = vld [vmem:[%s1 + $0x4c] sm:$0xf]
    %v338 = vld [vmem:[%s1 + $0x50] sm:$0xf]
    %v339 = vld [vmem:[%s1 + $0x54] sm:$0xf]
    %v340 = vld [vmem:[%s1 + $0x58] sm:$0xf]
    %v341 = vld [vmem:[%s1 + $0x5c] sm:$0xf]
    %v342 = vld [vmem:[%s1 + $0x60] sm:$0xf]
    %v343 = vld [vmem:[%s1 + $0x64] sm:$0xf]
    %v344 = vld [vmem:[%s1 + $0x68] sm:$0xf]
    %v345 = vld [vmem:[%s1 + $0x6c] sm:$0xf]
    %v346 = vld [vmem:[%s1 + $0x70] sm:$0xf]
    %v347 = vld [vmem:[%s1 + $0x74] sm:$0xf]
    %v348 = vld [vmem:[%s1 + $0x78] sm:$0xf]
    %v349 = vld [vmem:[%s1 + $0x7c] sm:$0xf]
    %v354 = vunpack.c.l.b16 %v314
    %v355 = vunpack.c.h.b16 %v314
    %v356 = vunpack.c.l.b16 %v315
    %v357 = vunpack.c.h.b16 %v315
    %v358 = vunpack.c.l.b16 %v316
    %v359 = vunpack.c.h.b16 %v316
    %v360 = vunpack.c.l.b16 %v317
    %v361 = vunpack.c.h.b16 %v317
    %v362 = vpack.c.b16 %v356, %v354
    %v363 = vpack.c.b16 %v357, %v355
    %v364 = vpack.c.b16 %v360, %v358
    %v365 = vpack.c.b16 %v361, %v359
    %v402 = vunpack.c.l.b16 %v318
    %v403 = vunpack.c.l.b16 %v319
    %v404 = vunpack.c.l.b16 %v320
    %v405 = vunpack.c.l.b16 %v321
    %v406 = vunpack.c.l.b16 %v322
    %v407 = vunpack.c.l.b16 %v323
    %v408 = vunpack.c.l.b16 %v324
    %v409 = vunpack.c.l.b16 %v325
    %v410 = vunpack.c.l.b16 %v326
    %v411 = vunpack.c.l.b16 %v327
    %v412 = vunpack.c.l.b16 %v328
    %v413 = vunpack.c.l.b16 %v329
    %v414 = vunpack.c.l.b16 %v330
    %v415 = vunpack.c.l.b16 %v331
    %v416 = vunpack.c.l.b16 %v332
    %v417 = vunpack.c.l.b16 %v333
    %v418 = vunpack.c.l.b16 %v334
    %v419 = vunpack.c.l.b16 %v335
    %v420 = vunpack.c.l.b16 %v336
    %v421 = vunpack.c.l.b16 %v337
    %v422 = vunpack.c.l.b16 %v338
    %v423 = vunpack.c.l.b16 %v339
    %v424 = vunpack.c.l.b16 %v340
    %v425 = vunpack.c.l.b16 %v341
    %v426 = vunpack.c.l.b16 %v342
    %v427 = vunpack.c.l.b16 %v343
    %v428 = vunpack.c.l.b16 %v344
    %v429 = vunpack.c.l.b16 %v345
    %v430 = vunpack.c.l.b16 %v346
    %v431 = vunpack.c.l.b16 %v347
    %v432 = vunpack.c.l.b16 %v348
    %v433 = vunpack.c.l.b16 %v349
    %v434 = vpack.c.b16 %v403, %v402
    %v435 = vpack.c.b16 %v405, %v404
    %v436 = vpack.c.b16 %v407, %v406
    %v437 = vpack.c.b16 %v409, %v408
    %v438 = vpack.c.b16 %v411, %v410
    %v439 = vpack.c.b16 %v413, %v412
    %v440 = vpack.c.b16 %v415, %v414
    %v441 = vpack.c.b16 %v417, %v416
    %v442 = vpack.c.b16 %v419, %v418
    %v443 = vpack.c.b16 %v421, %v420
    %v444 = vpack.c.b16 %v423, %v422
    %v445 = vpack.c.b16 %v425, %v424
    %v446 = vpack.c.b16 %v427, %v426
    %v447 = vpack.c.b16 %v429, %v428
    %v448 = vpack.c.b16 %v431, %v430
    %v449 = vpack.c.b16 %v433, %v432
    %466 = vmatprep.subr.bf16.mxu0 0
    %467 = vmatpush1.bf16.msra.mxu0 %v441
    %468 = vmatprep.subr.bf16.mxu0 0
    %469 = vmatpush1.bf16.msra.mxu0 %v440
    %470 = vmatprep.subr.bf16.mxu0 0
    %471 = vmatpush1.bf16.msra.mxu0 %v439
    %472 = vmatprep.subr.bf16.mxu0 0
    %473 = vmatpush1.bf16.msra.mxu0 %v438
    %474 = vmatprep.subr.bf16.mxu0 0
    %475 = vmatpush1.bf16.msra.mxu0 %v437
    %476 = vmatprep.subr.bf16.mxu0 0
    %477 = vmatpush1.bf16.msra.mxu0 %v436
    %478 = vmatprep.subr.bf16.mxu0 0
    %479 = vmatpush1.bf16.msra.mxu0 %v435
    %480 = vmatprep.subr.bf16.mxu0 0
    %481 = vmatpush1.bf16.msra.mxu0 %v434
    %482 = vmatprep.subr.bf16.mxu0 0
    %483 = vmatpush2.bf16.msra.mxu0 %v449
    %484 = vmatprep.subr.bf16.mxu0 0
    %485 = vmatpush2.bf16.msra.mxu0 %v448
    %486 = vmatprep.subr.bf16.mxu0 0
    %487 = vmatpush2.bf16.msra.mxu0 %v447
    %488 = vmatprep.subr.bf16.mxu0 0
    %489 = vmatpush2.bf16.msra.mxu0 %v446
    %490 = vmatprep.subr.bf16.mxu0 0
    %491 = vmatpush2.bf16.msra.mxu0 %v445
    %492 = vmatprep.subr.bf16.mxu0 0
    %493 = vmatpush2.bf16.msra.mxu0 %v444
    %494 = vmatprep.subr.bf16.mxu0 0
    %495 = vmatpush2.bf16.msra.mxu0 %v443
    %496 = vmatprep.subr.bf16.mxu0 0
    %497 = vmatpush2.bf16.msra.mxu0 %v442
    %498 = vmatprep.mubr.bf16.mxu0 %v363
    %499 = vmatmul.mubr.bf16.gmra.mxu0 %v362
    %v500 = vpop.f32.mrf.mxu0
    %v501 = vadd.f32 0.0, %v500
    %v502 = vpop.f32.mrf.mxu0
    %v503 = vpop.f32.mrf.mxu0
    %v504 = vadd.f32 0.0, %v503
    %v505 = vpop.f32.mrf.mxu0
    %506 = vmatprep.mubr.bf16.mxu0 %v365
    %507 = vmatmul.mubr.bf16.gmra.mxu0 %v364
    %v508 = vpop.f32.mrf.mxu0
    %v509 = vadd.f32 0.0, %v508
    %v510 = vpop.f32.mrf.mxu0
    %v511 = vpop.f32.mrf.mxu0
    %v512 = vadd.f32 0.0, %v511
    %v513 = vpop.f32.mrf.mxu0
    %514 = vdwg.mxu0
    %v515 = vadd.f32 %v501, %v504
    %v516 = vadd.f32 %v515, %v509
    %vm517 = vcmask 1041408
    %v518 = vsel %vm517, %v512, 0.0
    %v519 = vadd.f32 %v516, %v518
    %v520 = vrot.slane %v519, 4
    %v521 = vadd.f32 %v519, %v520
    %v522 = vrot.slane %v521, 2
    %v523 = vadd.f32 %v521, %v522
    %v524 = vrot.slane %v523, 1
    %v525 = vadd.f32 %v523, %v524
    %v526 = vmul.f32 %v501, %v501
    %v527 = vmul.f32 %v504, %v504
    %v528 = vmul.f32 %v509, %v509
    %v529 = vmul.f32 %v512, %v512
    %v530 = vadd.f32 %v526, %v527
    %v531 = vadd.f32 %v530, %v528
    %v532 = vsel %vm517, %v529, 0.0
    %v533 = vadd.f32 %v531, %v532
    %v534 = vrot.slane %v533, 4
    %v535 = vadd.f32 %v533, %v534
    %v536 = vrot.slane %v535, 2
    %v537 = vadd.f32 %v535, %v536
    %v538 = vrot.slane %v537, 1
    %v539 = vadd.f32 %v537, %v538
    %v540 = vlaneseq
    %v541 = vshrl.u32 %v540, 7
    %v542 = vlaneseq
    %v543 = vand.u32 %v542, 127
    %vm544 = vcmp.eq.s32.totalorder %v541, %v543
    %v545 = vsel %vm544, 1, 0
    %v546 = vcvt.s32.f32 %v545
    %548 = vrot.lane.b32.xlu0 %v546, 8
    %v549 = vpop.permute.xlu0 %548
    %551 = vrot.lane.b32.xlu0 %v546, 16
    %v552 = vpop.permute.xlu0 %551
    %554 = vrot.lane.b32.xlu0 %v546, 24
    %v555 = vpop.permute.xlu0 %554
    %557 = vrot.lane.b32.xlu0 %v546, 32
    %v558 = vpop.permute.xlu0 %557
    %560 = vrot.lane.b32.xlu0 %v546, 40
    %v561 = vpop.permute.xlu0 %560
    %563 = vrot.lane.b32.xlu0 %v546, 48
    %v564 = vpop.permute.xlu0 %563
    %566 = vrot.lane.b32.xlu0 %v546, 56
    %v567 = vpop.permute.xlu0 %566
    %569 = vrot.lane.b32.xlu0 %v546, 64
    %v570 = vpop.permute.xlu0 %569
    %572 = vrot.lane.b32.xlu0 %v546, 72
    %v573 = vpop.permute.xlu0 %572
    %575 = vrot.lane.b32.xlu0 %v546, 80
    %v576 = vpop.permute.xlu0 %575
    %578 = vrot.lane.b32.xlu0 %v546, 88
    %v579 = vpop.permute.xlu0 %578
    %581 = vrot.lane.b32.xlu0 %v546, 96
    %v582 = vpop.permute.xlu0 %581
    %584 = vrot.lane.b32.xlu0 %v546, 104
    %v585 = vpop.permute.xlu0 %584
    %587 = vrot.lane.b32.xlu0 %v546, 112
    %v588 = vpop.permute.xlu0 %587
    %590 = vrot.lane.b32.xlu0 %v546, 120
    %v591 = vpop.permute.xlu0 %590
    %vm593 = vcmask 64512
    %v594 = vsel %vm593, %v546, %v549
    %vm595 = vcmask 130048
    %v596 = vsel %vm595, %v594, %v552
    %vm597 = vcmask 195584
    %v598 = vsel %vm597, %v596, %v555
    %vm599 = vcmask 261120
    %v600 = vsel %vm599, %v598, %v558
    %vm601 = vcmask 326656
    %v602 = vsel %vm601, %v600, %v561
    %vm603 = vcmask 392192
    %v604 = vsel %vm603, %v602, %v564
    %vm605 = vcmask 457728
    %v606 = vsel %vm605, %v604, %v567
    %vm607 = vcmask 523264
    %v608 = vsel %vm607, %v606, %v570
    %vm609 = vcmask 588800
    %v610 = vsel %vm609, %v608, %v573
    %vm611 = vcmask 654336
    %v612 = vsel %vm611, %v610, %v576
    %vm613 = vcmask 719872
    %v614 = vsel %vm613, %v612, %v579
    %vm615 = vcmask 785408
    %v616 = vsel %vm615, %v614, %v582
    %vm617 = vcmask 850944
    %v618 = vsel %vm617, %v616, %v585
    %vm619 = vcmask 916480
    %v620 = vsel %vm619, %v618, %v588
    %vm621 = vcmask 982016
    %v622 = vsel %vm621, %v620, %v591
    %623 = vmatprep.subr.mxu0 0.0
    %624 = vmatpush1.msra.mxu0 %v546
    %625 = vmatprep.subr.mxu0 0.0
    %626 = vmatpush1.msra.mxu0 %v546
    %627 = vmatprep.subr.mxu0 0.0
    %628 = vmatpush1.msra.mxu0 %v546
    %629 = vmatprep.subr.mxu0 0.0
    %630 = vmatpush1.msra.mxu0 %v546
    %631 = vmatprep.subr.mxu0 0.0
    %632 = vmatpush1.msra.mxu0 %v546
    %633 = vmatprep.subr.mxu0 0.0
    %634 = vmatpush1.msra.mxu0 %v546
    %635 = vmatprep.subr.mxu0 0.0
    %636 = vmatpush1.msra.mxu0 %v546
    %637 = vmatprep.subr.mxu0 0.0
    %638 = vmatpush1.msra.mxu0 %v546
    %639 = vmatprep.subr.mxu0 0.0
    %640 = vmatpush1.msra.mxu0 %v546
    %641 = vmatprep.subr.mxu0 0.0
    %642 = vmatpush1.msra.mxu0 %v546
    %643 = vmatprep.subr.mxu0 0.0
    %644 = vmatpush1.msra.mxu0 %v546
    %645 = vmatprep.subr.mxu0 0.0
    %646 = vmatpush1.msra.mxu0 %v546
    %647 = vmatprep.subr.mxu0 0.0
    %648 = vmatpush1.msra.mxu0 %v546
    %649 = vmatprep.subr.mxu0 0.0
    %650 = vmatpush1.msra.mxu0 %v546
    %651 = vmatprep.subr.mxu0 0.0
    %652 = vmatpush1.msra.mxu0 %v546
    %653 = vmatprep.subr.mxu0 0.0
    %654 = vmatpush1.msra.mxu0 %v546
    %655 = vmatprep.subr.mxu0 0.0
    %656 = vmatpush2.msra.mxu0 0.0
    %657 = vmatprep.subr.mxu0 0.0
    %658 = vmatpush2.msra.mxu0 0.0
    %659 = vmatprep.subr.mxu0 0.0
    %660 = vmatpush2.msra.mxu0 0.0
    %661 = vmatprep.subr.mxu0 0.0
    %662 = vmatpush2.msra.mxu0 0.0
    %663 = vmatprep.subr.mxu0 0.0
    %664 = vmatpush2.msra.mxu0 0.0
    %665 = vmatprep.subr.mxu0 0.0
    %666 = vmatpush2.msra.mxu0 0.0
    %667 = vmatprep.subr.mxu0 0.0
    %668 = vmatpush2.msra.mxu0 0.0
    %669 = vmatprep.subr.mxu0 0.0
    %670 = vmatpush2.msra.mxu0 0.0
    %671 = vmatprep.subr.mxu0 0.0
    %672 = vmatpush2.msra.mxu0 0.0
    %673 = vmatprep.subr.mxu0 0.0
    %674 = vmatpush2.msra.mxu0 0.0
    %675 = vmatprep.subr.mxu0 0.0
    %676 = vmatpush2.msra.mxu0 0.0
    %677 = vmatprep.subr.mxu0 0.0
    %678 = vmatpush2.msra.mxu0 0.0
    %679 = vmatprep.subr.mxu0 0.0
    %680 = vmatpush2.msra.mxu0 0.0
    %681 = vmatprep.subr.mxu0 0.0
    %682 = vmatpush2.msra.mxu0 0.0
    %683 = vmatprep.subr.mxu0 0.0
    %684 = vmatpush2.msra.mxu0 0.0
    %685 = vmatprep.subr.mxu0 0.0
    %686 = vmatpush2.msra.mxu0 0.0
    %687 = vmatprep.mubr.f32.mxu0 0.0
    %688 = vmatmul.mubr.f32.gmra.mxu0 %v525
    %v689 = vpop.f32.mrf.mxu0
    %v690 = vadd.f32 0.0, %v689
    %v691 = vpop.f32.mrf.mxu0
    %692 = vdwg.mxu0
    %v693 = vmul.f32 %v690, 0.00295858
    %694 = vmatprep.subr.mxu0 0.0
    %695 = vmatpush1.msra.mxu0 %v546
    %696 = vmatprep.subr.mxu0 0.0
    %697 = vmatpush1.msra.mxu0 %v546
    %698 = vmatprep.subr.mxu0 0.0
    %699 = vmatpush1.msra.mxu0 %v546
    %700 = vmatprep.subr.mxu0 0.0
    %701 = vmatpush1.msra.mxu0 %v546
    %702 = vmatprep.subr.mxu0 0.0
    %703 = vmatpush1.msra.mxu0 %v546
    %704 = vmatprep.subr.mxu0 0.0
    %705 = vmatpush1.msra.mxu0 %v546
    %706 = vmatprep.subr.mxu0 0.0
    %707 = vmatpush1.msra.mxu0 %v546
    %708 = vmatprep.subr.mxu0 0.0
    %709 = vmatpush1.msra.mxu0 %v546
    %710 = vmatprep.subr.mxu0 0.0
    %711 = vmatpush1.msra.mxu0 %v546
    %712 = vmatprep.subr.mxu0 0.0
    %713 = vmatpush1.msra.mxu0 %v546
    %714 = vmatprep.subr.mxu0 0.0
    %715 = vmatpush1.msra.mxu0 %v546
    %716 = vmatprep.subr.mxu0 0.0
    %717 = vmatpush1.msra.mxu0 %v546
    %718 = vmatprep.subr.mxu0 0.0
    %719 = vmatpush1.msra.mxu0 %v546
    %720 = vmatprep.subr.mxu0 0.0
    %721 = vmatpush1.msra.mxu0 %v546
    %722 = vmatprep.subr.mxu0 0.0
    %723 = vmatpush1.msra.mxu0 %v546
    %724 = vmatprep.subr.mxu0 0.0
    %725 = vmatpush1.msra.mxu0 %v546
    %726 = vmatprep.subr.mxu0 0.0
    %727 = vmatpush2.msra.mxu0 0.0
    %728 = vmatprep.subr.mxu0 0.0
    %729 = vmatpush2.msra.mxu0 0.0
    %730 = vmatprep.subr.mxu0 0.0
    %731 = vmatpush2.msra.mxu0 0.0
    %732 = vmatprep.subr.mxu0 0.0
    %733 = vmatpush2.msra.mxu0 0.0
    %734 = vmatprep.subr.mxu0 0.0
    %735 = vmatpush2.msra.mxu0 0.0
    %736 = vmatprep.subr.mxu0 0.0
    %737 = vmatpush2.msra.mxu0 0.0
    %738 = vmatprep.subr.mxu0 0.0
    %739 = vmatpush2.msra.mxu0 0.0
    %740 = vmatprep.subr.mxu0 0.0
    %741 = vmatpush2.msra.mxu0 0.0
    %742 = vmatprep.subr.mxu0 0.0
    %743 = vmatpush2.msra.mxu0 0.0
    %744 = vmatprep.subr.mxu0 0.0
    %745 = vmatpush2.msra.mxu0 0.0
    %746 = vmatprep.subr.mxu0 0.0
    %747 = vmatpush2.msra.mxu0 0.0
    %748 = vmatprep.subr.mxu0 0.0
    %749 = vmatpush2.msra.mxu0 0.0
    %750 = vmatprep.subr.mxu0 0.0
    %751 = vmatpush2.msra.mxu0 0.0
    %752 = vmatprep.subr.mxu0 0.0
    %753 = vmatpush2.msra.mxu0 0.0
    %754 = vmatprep.subr.mxu0 0.0
    %755 = vmatpush2.msra.mxu0 0.0
    %756 = vmatprep.subr.mxu0 0.0
    %757 = vmatpush2.msra.mxu0 0.0
    %758 = vmatprep.mubr.f32.mxu0 0.0
    %759 = vmatmul.mubr.f32.gmra.mxu0 %v539
    %v760 = vpop.f32.mrf.mxu0
    %v761 = vadd.f32 0.0, %v760
    %v762 = vpop.f32.mrf.mxu0
    %763 = vdwg.mxu0
    %v764 = vmul.f32 %v761, 0.00295858
    %v765 = vmul.f32 %v693, %v693
    %v766 = vsub.f32 %v764, %v765
    %v767 = vld [vmem:[%s2] sm:$0x1]
    %v768 = vld [vmem:[%s2 + $0x1] sm:$0x1]
    %v769 = vadd.f32 %v766, 1e-05
    %v770 = vrsqrt.pop %v769
    %v771 = vmul.f32 %v767, %v770
    %v772 = vmul.f32 %v693, %v771
    %v773 = vsub.f32 %v768, %v772
    %v775 = vsel %vm593, %v771, 0
    %777 = vmatprep.subr.mxu0 0.0
    %778 = vmatpush1.msra.mxu0 0.0
    %779 = vmatprep.subr.mxu0 0.0
    %780 = vmatpush1.msra.mxu0 0.0
    %781 = vmatprep.subr.mxu0 0.0
    %782 = vmatpush1.msra.mxu0 0.0
    %783 = vmatprep.subr.mxu0 0.0
    %784 = vmatpush1.msra.mxu0 0.0
    %785 = vmatprep.subr.mxu0 0.0
    %786 = vmatpush1.msra.mxu0 0.0
    %787 = vmatprep.subr.mxu0 0.0
    %788 = vmatpush1.msra.mxu0 0.0
    %789 = vmatprep.subr.mxu0 0.0
    %790 = vmatpush1.msra.mxu0 0.0
    %791 = vmatprep.subr.mxu0 0.0
    %792 = vmatpush1.msra.mxu0 0.0
    %793 = vmatprep.subr.mxu0 0.0
    %794 = vmatpush1.msra.mxu0 0.0
    %795 = vmatprep.subr.mxu0 0.0
    %796 = vmatpush1.msra.mxu0 0.0
    %797 = vmatprep.subr.mxu0 0.0
    %798 = vmatpush1.msra.mxu0 0.0
    %799 = vmatprep.subr.mxu0 0.0
    %800 = vmatpush1.msra.mxu0 0.0
    %801 = vmatprep.subr.mxu0 0.0
    %802 = vmatpush1.msra.mxu0 0.0
    %803 = vmatprep.subr.mxu0 0.0
    %804 = vmatpush1.msra.mxu0 0.0
    %805 = vmatprep.subr.mxu0 0.0
    %806 = vmatpush1.msra.mxu0 0.0
    %807 = vmatprep.subr.mxu0 0.0
    %808 = vmatpush1.msra.mxu0 %v622
    %809 = vmatprep.subr.mxu0 0.0
    %810 = vmatpush2.msra.mxu0 0.0
    %811 = vmatprep.subr.mxu0 0.0
    %812 = vmatpush2.msra.mxu0 0.0
    %813 = vmatprep.subr.mxu0 0.0
    %814 = vmatpush2.msra.mxu0 0.0
    %815 = vmatprep.subr.mxu0 0.0
    %816 = vmatpush2.msra.mxu0 0.0
    %817 = vmatprep.subr.mxu0 0.0
    %818 = vmatpush2.msra.mxu0 0.0
    %819 = vmatprep.subr.mxu0 0.0
    %820 = vmatpush2.msra.mxu0 0.0
    %821 = vmatprep.subr.mxu0 0.0
    %822 = vmatpush2.msra.mxu0 0.0
    %823 = vmatprep.subr.mxu0 0.0
    %824 = vmatpush2.msra.mxu0 0.0
    %825 = vmatprep.subr.mxu0 0.0
    %826 = vmatpush2.msra.mxu0 0.0
    %827 = vmatprep.subr.mxu0 0.0
    %828 = vmatpush2.msra.mxu0 0.0
    %829 = vmatprep.subr.mxu0 0.0
    %830 = vmatpush2.msra.mxu0 0.0
    %831 = vmatprep.subr.mxu0 0.0
    %832 = vmatpush2.msra.mxu0 0.0
    %833 = vmatprep.subr.mxu0 0.0
    %834 = vmatpush2.msra.mxu0 0.0
    %835 = vmatprep.subr.mxu0 0.0
    %836 = vmatpush2.msra.mxu0 0.0
    %837 = vmatprep.subr.mxu0 0.0
    %838 = vmatpush2.msra.mxu0 0.0
    %839 = vmatprep.subr.mxu0 0.0
    %840 = vmatpush2.msra.mxu0 0.0
    %841 = vmatprep.mubr.f32.mxu0 0.0
    %842 = vmatmul.mubr.f32.gmra.mxu0 %v775
    %v843 = vpop.f32.mrf.mxu0
    %v844 = vadd.f32 0.0, %v843
    %v845 = vpop.f32.mrf.mxu0
    %846 = vdwg.mxu0
    %v848 = vsel %vm593, %v773, 0
    %850 = vmatprep.subr.mxu0 0.0
    %851 = vmatpush1.msra.mxu0 0.0
    %852 = vmatprep.subr.mxu0 0.0
    %853 = vmatpush1.msra.mxu0 0.0
    %854 = vmatprep.subr.mxu0 0.0
    %855 = vmatpush1.msra.mxu0 0.0
    %856 = vmatprep.subr.mxu0 0.0
    %857 = vmatpush1.msra.mxu0 0.0
    %858 = vmatprep.subr.mxu0 0.0
    %859 = vmatpush1.msra.mxu0 0.0
    %860 = vmatprep.subr.mxu0 0.0
    %861 = vmatpush1.msra.mxu0 0.0
    %862 = vmatprep.subr.mxu0 0.0
    %863 = vmatpush1.msra.mxu0 0.0
    %864 = vmatprep.subr.mxu0 0.0
    %865 = vmatpush1.msra.mxu0 0.0
    %866 = vmatprep.subr.mxu0 0.0
    %867 = vmatpush1.msra.mxu0 0.0
    %868 = vmatprep.subr.mxu0 0.0
    %869 = vmatpush1.msra.mxu0 0.0
    %870 = vmatprep.subr.mxu0 0.0
    %871 = vmatpush1.msra.mxu0 0.0
    %872 = vmatprep.subr.mxu0 0.0
    %873 = vmatpush1.msra.mxu0 0.0
    %874 = vmatprep.subr.mxu0 0.0
    %875 = vmatpush1.msra.mxu0 0.0
    %876 = vmatprep.subr.mxu0 0.0
    %877 = vmatpush1.msra.mxu0 0.0
    %878 = vmatprep.subr.mxu0 0.0
    %879 = vmatpush1.msra.mxu0 0.0
    %880 = vmatprep.subr.mxu0 0.0
    %881 = vmatpush1.msra.mxu0 %v622
    %882 = vmatprep.subr.mxu0 0.0
    %883 = vmatpush2.msra.mxu0 0.0
    %884 = vmatprep.subr.mxu0 0.0
    %885 = vmatpush2.msra.mxu0 0.0
    %886 = vmatprep.subr.mxu0 0.0
    %887 = vmatpush2.msra.mxu0 0.0
    %888 = vmatprep.subr.mxu0 0.0
    %889 = vmatpush2.msra.mxu0 0.0
    %890 = vmatprep.subr.mxu0 0.0
    %891 = vmatpush2.msra.mxu0 0.0
    %892 = vmatprep.subr.mxu0 0.0
    %893 = vmatpush2.msra.mxu0 0.0
    %894 = vmatprep.subr.mxu0 0.0
    %895 = vmatpush2.msra.mxu0 0.0
    %896 = vmatprep.subr.mxu0 0.0
    %897 = vmatpush2.msra.mxu0 0.0
    %898 = vmatprep.subr.mxu0 0.0
    %899 = vmatpush2.msra.mxu0 0.0
    %900 = vmatprep.subr.mxu0 0.0
    %901 = vmatpush2.msra.mxu0 0.0
    %902 = vmatprep.subr.mxu0 0.0
    %903 = vmatpush2.msra.mxu0 0.0
    %904 = vmatprep.subr.mxu0 0.0
    %905 = vmatpush2.msra.mxu0 0.0
    %906 = vmatprep.subr.mxu0 0.0
    %907 = vmatpush2.msra.mxu0 0.0
    %908 = vmatprep.subr.mxu0 0.0
    %909 = vmatpush2.msra.mxu0 0.0
    %910 = vmatprep.subr.mxu0 0.0
    %911 = vmatpush2.msra.mxu0 0.0
    %912 = vmatprep.subr.mxu0 0.0
    %913 = vmatpush2.msra.mxu0 0.0
    %914 = vmatprep.mubr.f32.mxu0 0.0
    %915 = vmatmul.mubr.f32.gmra.mxu0 %v848
    %v916 = vpop.f32.mrf.mxu0
    %v917 = vadd.f32 0.0, %v916
    %v918 = vpop.f32.mrf.mxu0
    %919 = vdwg.mxu0
    %v920 = vlaneseq
    %v921 = vshrl.u32 %v920, 7
    %v922 = vsub.s32 0, %v921
    %v923 = vrot.slane %v844, %v922
    %v924 = vmul.f32 %v501, %v923
    %v925 = vmul.f32 %v504, %v923
    %v926 = vmul.f32 %v509, %v923
    %v927 = vmul.f32 %v512, %v923
    %v928 = vlaneseq
    %v929 = vshrl.u32 %v928, 7
    %v930 = vsub.s32 0, %v929
    %v931 = vrot.slane %v917, %v930
    %v932 = vadd.f32 %v924, %v931
    %v933 = vadd.f32 %v925, %v931
    %v934 = vadd.f32 %v926, %v931
    %v935 = vadd.f32 %v927, %v931
    %v936 = vmax.f32 %v932, 0.0
    %v937 = vmax.f32 %v933, 0.0
    %v938 = vmax.f32 %v934, 0.0
    %v939 = vmax.f32 %v935, 0.0
    %vm942 = vcmask 1040384
    %v943 = vrot.slane %v937, 7
    %v944 = vrot.slane %v938, 7
    %v945 = vsel %vm942, %v943, %v944
    %vm948 = vcmask 1045504
    %v949 = vsel %vm948, %v936, %v943
    %v951 = vrot.slane %v936, 1
    %v953 = vsel %vm948, %v951, %v937
    %v954 = vrot.slane %v936, 2
    %vm956 = vcmask 1046528
    %v957 = vrot.slane %v937, 1
    %v958 = vrot.slane %v938, 1
    %v959 = vsel %vm956, %v957, %v958
    %v962 = vsel %vm948, %v954, %v959
    %vm963 = vcmask 1044480
    %v964 = vrot.slane %v936, 3
    %v965 = vrot.slane %v937, 3
    %v966 = vsel %vm963, %v964, %v965
    %v968 = vrot.slane %v938, 2
    %v970 = vsel %vm948, %v966, %v968
    %vm971 = vcmask 1043456
    %v972 = vrot.slane %v936, 4
    %v973 = vrot.slane %v937, 4
    %v974 = vsel %vm971, %v972, %v973
    %v976 = vrot.slane %v938, 3
    %v978 = vsel %vm948, %v974, %v976
    %vm979 = vcmask 1042432
    %v980 = vrot.slane %v936, 5
    %v981 = vrot.slane %v937, 5
    %v982 = vsel %vm979, %v980, %v981
    %v984 = vrot.slane %v938, 4
    %v986 = vsel %vm948, %v982, %v984
    %v987 = vrot.slane %v936, 6
    %v988 = vrot.slane %v937, 6
    %v989 = vsel %vm517, %v987, %v988
    %v992 = vrot.slane %v938, 5
    %v993 = vrot.slane %v939, 5
    %v994 = vsel %vm979, %v992, %v993
    %v997 = vsel %vm948, %v989, %v992
    %v998 = vrot.slane %v936, 7
    %v999 = vsel %vm942, %v998, %v943
    %v1001 = vrot.slane %v938, 6
    %v1002 = vrot.slane %v939, 6
    %v1003 = vsel %vm517, %v1001, %v1002
    %v1006 = vsel %vm948, %v999, %v1001
    %v1007 = vpack.c.bf16 %v945, %v949
    %v1008 = vpack.c.bf16 %v938, %v953
    %v1009 = vpack.c.bf16 %v958, %v962
    %v1010 = vpack.c.bf16 %v968, %v970
    %v1011 = vpack.c.bf16 %v976, %v978
    %v1012 = vpack.c.bf16 %v984, %v986
    %v1013 = vpack.c.bf16 %v994, %v997
    %v1014 = vpack.c.bf16 %v1003, %v1006
    %s1015 = smul.u32 4, 128
    %s1016 = smul.u32 %s1015, 2
    %s1017 = sshll.u32 %s1016, 4
    %1018 = dma.done [#allocation3], %s1017
    %v1019 = vld [vmem:[#allocation2] sm:$0xff]
    %v1020 = vld [vmem:[#allocation2 + $0x8] sm:$0xff]
    %v1021 = vld [vmem:[#allocation2 + $0x10] sm:$0xff]
    %v1022 = vld [vmem:[#allocation2 + $0x18] sm:$0xff]
    %v1023 = vld [vmem:[#allocation2 + $0x20] sm:$0xff]
    %v1024 = vld [vmem:[#allocation2 + $0x28] sm:$0xff]
    %v1025 = vld [vmem:[#allocation2 + $0x30] sm:$0xff]
    %v1026 = vld [vmem:[#allocation2 + $0x38] sm:$0xff]
    %v1027 = vld [vmem:[#allocation2 + $0x40] sm:$0xff]
    %v1028 = vld [vmem:[#allocation2 + $0x48] sm:$0xff]
    %v1029 = vld [vmem:[#allocation2 + $0x50] sm:$0xff]
    %v1030 = vld [vmem:[#allocation2 + $0x58] sm:$0xff]
    %v1031 = vld [vmem:[#allocation2 + $0x60] sm:$0xff]
    %v1032 = vld [vmem:[#allocation2 + $0x68] sm:$0xff]
    %v1033 = vld [vmem:[#allocation2 + $0x70] sm:$0xff]
    %v1034 = vld [vmem:[#allocation2 + $0x78] sm:$0xff]
    %v1035 = vld [vmem:[#allocation2 + $0x80] sm:$0xff]
    %v1036 = vld [vmem:[#allocation2 + $0x88] sm:$0xff]
    %v1037 = vld [vmem:[#allocation2 + $0x90] sm:$0xff]
    %v1038 = vld [vmem:[#allocation2 + $0x98] sm:$0xff]
    %v1039 = vld [vmem:[#allocation2 + $0xa0] sm:$0xff]
    %v1040 = vld [vmem:[#allocation2 + $0xa8] sm:$0xff]
    %v1041 = vld [vmem:[#allocation2 + $0xb0] sm:$0xff]
    %v1042 = vld [vmem:[#allocation2 + $0xb8] sm:$0xff]
    %v1043 = vld [vmem:[#allocation2 + $0xc0] sm:$0xff]
    %v1044 = vld [vmem:[#allocation2 + $0xc8] sm:$0xff]
    %v1045 = vld [vmem:[#allocation2 + $0xd0] sm:$0xff]
    %v1046 = vld [vmem:[#allocation2 + $0xd8] sm:$0xff]
    %v1047 = vld [vmem:[#allocation2 + $0xe0] sm:$0xff]
    %v1048 = vld [vmem:[#allocation2 + $0xe8] sm:$0xff]
    %v1049 = vld [vmem:[#allocation2 + $0xf0] sm:$0xff]
    %v1050 = vld [vmem:[#allocation2 + $0xf8] sm:$0xff]
    %v1051 = vld [vmem:[#allocation2 + $0x100] sm:$0xff]
    %v1052 = vld [vmem:[#allocation2 + $0x108] sm:$0xff]
    %v1053 = vld [vmem:[#allocation2 + $0x110] sm:$0xff]
    %v1054 = vld [vmem:[#allocation2 + $0x118] sm:$0xff]
    %v1055 = vld [vmem:[#allocation2 + $0x120] sm:$0xff]
    %v1056 = vld [vmem:[#allocation2 + $0x128] sm:$0xff]
    %v1057 = vld [vmem:[#allocation2 + $0x130] sm:$0xff]
    %v1058 = vld [vmem:[#allocation2 + $0x138] sm:$0xff]
    %v1059 = vld [vmem:[#allocation2 + $0x140] sm:$0xff]
    %v1060 = vld [vmem:[#allocation2 + $0x148] sm:$0xff]
    %v1061 = vld [vmem:[#allocation2 + $0x150] sm:$0xff]
    %v1062 = vld [vmem:[#allocation2 + $0x158] sm:$0xff]
    %v1063 = vld [vmem:[#allocation2 + $0x160] sm:$0xff]
    %v1064 = vld [vmem:[#allocation2 + $0x168] sm:$0xff]
    %v1065 = vld [vmem:[#allocation2 + $0x170] sm:$0xff]
    %v1066 = vld [vmem:[#allocation2 + $0x178] sm:$0xff]
    %v1067 = vld [vmem:[#allocation2 + $0x180] sm:$0xff]
    %v1068 = vld [vmem:[#allocation2 + $0x188] sm:$0xff]
    %v1069 = vld [vmem:[#allocation2 + $0x190] sm:$0xff]
    %v1070 = vld [vmem:[#allocation2 + $0x198] sm:$0xff]
    %v1071 = vld [vmem:[#allocation2 + $0x1a0] sm:$0xff]
    %v1072 = vld [vmem:[#allocation2 + $0x1a8] sm:$0xff]
    %v1073 = vld [vmem:[#allocation2 + $0x1b0] sm:$0xff]
    %v1074 = vld [vmem:[#allocation2 + $0x1b8] sm:$0xff]
    %v1075 = vld [vmem:[#allocation2 + $0x1c0] sm:$0xff]
    %v1076 = vld [vmem:[#allocation2 + $0x1c8] sm:$0xff]
    %v1077 = vld [vmem:[#allocation2 + $0x1d0] sm:$0xff]
    %v1078 = vld [vmem:[#allocation2 + $0x1d8] sm:$0xff]
    %v1079 = vld [vmem:[#allocation2 + $0x1e0] sm:$0xff]
    %v1080 = vld [vmem:[#allocation2 + $0x1e8] sm:$0xff]
    %v1081 = vld [vmem:[#allocation2 + $0x1f0] sm:$0xff]
    %v1082 = vld [vmem:[#allocation2 + $0x1f8] sm:$0xff]
    %v1083 = vld [vmem:[#allocation2 + $0x200] sm:$0xff]
    %v1084 = vld [vmem:[#allocation2 + $0x208] sm:$0xff]
    %v1085 = vld [vmem:[#allocation2 + $0x210] sm:$0xff]
    %v1086 = vld [vmem:[#allocation2 + $0x218] sm:$0xff]
    %v1087 = vld [vmem:[#allocation2 + $0x220] sm:$0xff]
    %v1088 = vld [vmem:[#allocation2 + $0x228] sm:$0xff]
    %v1089 = vld [vmem:[#allocation2 + $0x230] sm:$0xff]
    %v1090 = vld [vmem:[#allocation2 + $0x238] sm:$0xff]
    %v1091 = vld [vmem:[#allocation2 + $0x240] sm:$0xff]
    %v1092 = vld [vmem:[#allocation2 + $0x248] sm:$0xff]
    %v1093 = vld [vmem:[#allocation2 + $0x250] sm:$0xff]
    %v1094 = vld [vmem:[#allocation2 + $0x258] sm:$0xff]
    %v1095 = vld [vmem:[#allocation2 + $0x260] sm:$0xff]
    %v1096 = vld [vmem:[#allocation2 + $0x268] sm:$0xff]
    %v1097 = vld [vmem:[#allocation2 + $0x270] sm:$0xff]
    %v1098 = vld [vmem:[#allocation2 + $0x278] sm:$0xff]
    %v1099 = vld [vmem:[#allocation2 + $0x280] sm:$0xff]
    %v1100 = vld [vmem:[#allocation2 + $0x288] sm:$0xff]
    %v1101 = vld [vmem:[#allocation2 + $0x290] sm:$0xff]
    %v1102 = vld [vmem:[#allocation2 + $0x298] sm:$0xff]
    %v1103 = vld [vmem:[#allocation2 + $0x2a0] sm:$0xff]
    %v1104 = vld [vmem:[#allocation2 + $0x2a8] sm:$0xff]
    %v1105 = vld [vmem:[#allocation2 + $0x2b0] sm:$0xff]
    %v1106 = vld [vmem:[#allocation2 + $0x2b8] sm:$0xff]
    %v1107 = vld [vmem:[#allocation2 + $0x2c0] sm:$0xff]
    %v1108 = vld [vmem:[#allocation2 + $0x2c8] sm:$0xff]
    %v1109 = vld [vmem:[#allocation2 + $0x2d0] sm:$0xff]
    %v1110 = vld [vmem:[#allocation2 + $0x2d8] sm:$0xff]
    %v1111 = vld [vmem:[#allocation2 + $0x2e0] sm:$0xff]
    %v1112 = vld [vmem:[#allocation2 + $0x2e8] sm:$0xff]
    %v1113 = vld [vmem:[#allocation2 + $0x2f0] sm:$0xff]
    %v1114 = vld [vmem:[#allocation2 + $0x2f8] sm:$0xff]
    %v1115 = vld [vmem:[#allocation2 + $0x300] sm:$0xff]
    %v1116 = vld [vmem:[#allocation2 + $0x308] sm:$0xff]
    %v1117 = vld [vmem:[#allocation2 + $0x310] sm:$0xff]
    %v1118 = vld [vmem:[#allocation2 + $0x318] sm:$0xff]
    %v1119 = vld [vmem:[#allocation2 + $0x320] sm:$0xff]
    %v1120 = vld [vmem:[#allocation2 + $0x328] sm:$0xff]
    %v1121 = vld [vmem:[#allocation2 + $0x330] sm:$0xff]
    %v1122 = vld [vmem:[#allocation2 + $0x338] sm:$0xff]
    %v1123 = vld [vmem:[#allocation2 + $0x340] sm:$0xff]
    %v1124 = vld [vmem:[#allocation2 + $0x348] sm:$0xff]
    %v1125 = vld [vmem:[#allocation2 + $0x350] sm:$0xff]
    %v1126 = vld [vmem:[#allocation2 + $0x358] sm:$0xff]
    %v1127 = vld [vmem:[#allocation2 + $0x360] sm:$0xff]
    %v1128 = vld [vmem:[#allocation2 + $0x368] sm:$0xff]
    %v1129 = vld [vmem:[#allocation2 + $0x370] sm:$0xff]
    %v1130 = vld [vmem:[#allocation2 + $0x378] sm:$0xff]
    %v1131 = vld [vmem:[#allocation2 + $0x380] sm:$0xff]
    %v1132 = vld [vmem:[#allocation2 + $0x388] sm:$0xff]
    %v1133 = vld [vmem:[#allocation2 + $0x390] sm:$0xff]
    %v1134 = vld [vmem:[#allocation2 + $0x398] sm:$0xff]
    %v1135 = vld [vmem:[#allocation2 + $0x3a0] sm:$0xff]
    %v1136 = vld [vmem:[#allocation2 + $0x3a8] sm:$0xff]
    %v1137 = vld [vmem:[#allocation2 + $0x3b0] sm:$0xff]
    %v1138 = vld [vmem:[#allocation2 + $0x3b8] sm:$0xff]
    %v1139 = vld [vmem:[#allocation2 + $0x3c0] sm:$0xff]
    %v1140 = vld [vmem:[#allocation2 + $0x3c8] sm:$0xff]
    %v1141 = vld [vmem:[#allocation2 + $0x3d0] sm:$0xff]
    %v1142 = vld [vmem:[#allocation2 + $0x3d8] sm:$0xff]
    %v1143 = vld [vmem:[#allocation2 + $0x3e0] sm:$0xff]
    %v1144 = vld [vmem:[#allocation2 + $0x3e8] sm:$0xff]
    %v1145 = vld [vmem:[#allocation2 + $0x3f0] sm:$0xff]
    %v1146 = vld [vmem:[#allocation2 + $0x3f8] sm:$0xff]
    %v1275 = vunpack.c.l.b16 %v1019
    %v1276 = vunpack.c.h.b16 %v1019
    %v1277 = vunpack.c.l.b16 %v1020
    %v1278 = vunpack.c.h.b16 %v1020
    %v1279 = vunpack.c.l.b16 %v1021
    %v1280 = vunpack.c.h.b16 %v1021
    %v1281 = vunpack.c.l.b16 %v1022
    %v1282 = vunpack.c.h.b16 %v1022
    %v1283 = vunpack.c.l.b16 %v1023
    %v1284 = vunpack.c.h.b16 %v1023
    %v1285 = vunpack.c.l.b16 %v1024
    %v1286 = vunpack.c.h.b16 %v1024
    %v1287 = vunpack.c.l.b16 %v1025
    %v1288 = vunpack.c.h.b16 %v1025
    %v1289 = vunpack.c.l.b16 %v1026
    %v1290 = vunpack.c.h.b16 %v1026
    %v1291 = vunpack.c.l.b16 %v1027
    %v1292 = vunpack.c.h.b16 %v1027
    %v1293 = vunpack.c.l.b16 %v1028
    %v1294 = vunpack.c.h.b16 %v1028
    %v1295 = vunpack.c.l.b16 %v1029
    %v1296 = vunpack.c.h.b16 %v1029
    %v1297 = vunpack.c.l.b16 %v1030
    %v1298 = vunpack.c.h.b16 %v1030
    %v1299 = vunpack.c.l.b16 %v1031
    %v1300 = vunpack.c.h.b16 %v1031
    %v1301 = vunpack.c.l.b16 %v1032
    %v1302 = vunpack.c.h.b16 %v1032
    %v1303 = vunpack.c.l.b16 %v1033
    %v1304 = vunpack.c.h.b16 %v1033
    %v1305 = vunpack.c.l.b16 %v1034
    %v1306 = vunpack.c.h.b16 %v1034
    %v1307 = vunpack.c.l.b16 %v1035
    %v1308 = vunpack.c.h.b16 %v1035
    %v1309 = vunpack.c.l.b16 %v1036
    %v1310 = vunpack.c.h.b16 %v1036
    %v1311 = vunpack.c.l.b16 %v1037
    %v1312 = vunpack.c.h.b16 %v1037
    %v1313 = vunpack.c.l.b16 %v1038
    %v1314 = vunpack.c.h.b16 %v1038
    %v1315 = vunpack.c.l.b16 %v1039
    %v1316 = vunpack.c.h.b16 %v1039
    %v1317 = vunpack.c.l.b16 %v1040
    %v1318 = vunpack.c.h.b16 %v1040
    %v1319 = vunpack.c.l.b16 %v1041
    %v1320 = vunpack.c.h.b16 %v1041
    %v1321 = vunpack.c.l.b16 %v1042
    %v1322 = vunpack.c.h.b16 %v1042
    %v1323 = vunpack.c.l.b16 %v1043
    %v1324 = vunpack.c.h.b16 %v1043
    %v1325 = vunpack.c.l.b16 %v1044
    %v1326 = vunpack.c.h.b16 %v1044
    %v1327 = vunpack.c.l.b16 %v1045
    %v1328 = vunpack.c.h.b16 %v1045
    %v1329 = vunpack.c.l.b16 %v1046
    %v1330 = vunpack.c.h.b16 %v1046
    %v1331 = vunpack.c.l.b16 %v1047
    %v1332 = vunpack.c.h.b16 %v1047
    %v1333 = vunpack.c.l.b16 %v1048
    %v1334 = vunpack.c.h.b16 %v1048
    %v1335 = vunpack.c.l.b16 %v1049
    %v1336 = vunpack.c.h.b16 %v1049
    %v1337 = vunpack.c.l.b16 %v1050
    %v1338 = vunpack.c.h.b16 %v1050
    %v1339 = vunpack.c.l.b16 %v1051
    %v1340 = vunpack.c.h.b16 %v1051
    %v1341 = vunpack.c.l.b16 %v1052
    %v1342 = vunpack.c.h.b16 %v1052
    %v1343 = vunpack.c.l.b16 %v1053
    %v1344 = vunpack.c.h.b16 %v1053
    %v1345 = vunpack.c.l.b16 %v1054
    %v1346 = vunpack.c.h.b16 %v1054
    %v1347 = vunpack.c.l.b16 %v1055
    %v1348 = vunpack.c.h.b16 %v1055
    %v1349 = vunpack.c.l.b16 %v1056
    %v1350 = vunpack.c.h.b16 %v1056
    %v1351 = vunpack.c.l.b16 %v1057
    %v1352 = vunpack.c.h.b16 %v1057
    %v1353 = vunpack.c.l.b16 %v1058
    %v1354 = vunpack.c.h.b16 %v1058
    %v1355 = vunpack.c.l.b16 %v1059
    %v1356 = vunpack.c.h.b16 %v1059
    %v1357 = vunpack.c.l.b16 %v1060
    %v1358 = vunpack.c.h.b16 %v1060
    %v1359 = vunpack.c.l.b16 %v1061
    %v1360 = vunpack.c.h.b16 %v1061
    %v1361 = vunpack.c.l.b16 %v1062
    %v1362 = vunpack.c.h.b16 %v1062
    %v1363 = vunpack.c.l.b16 %v1063
    %v1364 = vunpack.c.h.b16 %v1063
    %v1365 = vunpack.c.l.b16 %v1064
    %v1366 = vunpack.c.h.b16 %v1064
    %v1367 = vunpack.c.l.b16 %v1065
    %v1368 = vunpack.c.h.b16 %v1065
    %v1369 = vunpack.c.l.b16 %v1066
    %v1370 = vunpack.c.h.b16 %v1066
    %v1371 = vunpack.c.l.b16 %v1067
    %v1372 = vunpack.c.h.b16 %v1067
    %v1373 = vunpack.c.l.b16 %v1068
    %v1374 = vunpack.c.h.b16 %v1068
    %v1375 = vunpack.c.l.b16 %v1069
    %v1376 = vunpack.c.h.b16 %v1069
    %v1377 = vunpack.c.l.b16 %v1070
    %v1378 = vunpack.c.h.b16 %v1070
    %v1379 = vunpack.c.l.b16 %v1071
    %v1380 = vunpack.c.h.b16 %v1071
    %v1381 = vunpack.c.l.b16 %v1072
    %v1382 = vunpack.c.h.b16 %v1072
    %v1383 = vunpack.c.l.b16 %v1073
    %v1384 = vunpack.c.h.b16 %v1073
    %v1385 = vunpack.c.l.b16 %v1074
    %v1386 = vunpack.c.h.b16 %v1074
    %v1387 = vunpack.c.l.b16 %v1075
    %v1388 = vunpack.c.h.b16 %v1075
    %v1389 = vunpack.c.l.b16 %v1076
    %v1390 = vunpack.c.h.b16 %v1076
    %v1391 = vunpack.c.l.b16 %v1077
    %v1392 = vunpack.c.h.b16 %v1077
    %v1393 = vunpack.c.l.b16 %v1078
    %v1394 = vunpack.c.h.b16 %v1078
    %v1395 = vunpack.c.l.b16 %v1079
    %v1396 = vunpack.c.h.b16 %v1079
    %v1397 = vunpack.c.l.b16 %v1080
    %v1398 = vunpack.c.h.b16 %v1080
    %v1399 = vunpack.c.l.b16 %v1081
    %v1400 = vunpack.c.h.b16 %v1081
    %v1401 = vunpack.c.l.b16 %v1082
    %v1402 = vunpack.c.h.b16 %v1082
    %v1403 = vunpack.c.l.b16 %v1083
    %v1404 = vunpack.c.h.b16 %v1083
    %v1405 = vunpack.c.l.b16 %v1084
    %v1406 = vunpack.c.h.b16 %v1084
    %v1407 = vunpack.c.l.b16 %v1085
    %v1408 = vunpack.c.h.b16 %v1085
    %v1409 = vunpack.c.l.b16 %v1086
    %v1410 = vunpack.c.h.b16 %v1086
    %v1411 = vunpack.c.l.b16 %v1087
    %v1412 = vunpack.c.h.b16 %v1087
    %v1413 = vunpack.c.l.b16 %v1088
    %v1414 = vunpack.c.h.b16 %v1088
    %v1415 = vunpack.c.l.b16 %v1089
    %v1416 = vunpack.c.h.b16 %v1089
    %v1417 = vunpack.c.l.b16 %v1090
    %v1418 = vunpack.c.h.b16 %v1090
    %v1419 = vunpack.c.l.b16 %v1091
    %v1420 = vunpack.c.h.b16 %v1091
    %v1421 = vunpack.c.l.b16 %v1092
    %v1422 = vunpack.c.h.b16 %v1092
    %v1423 = vunpack.c.l.b16 %v1093
    %v1424 = vunpack.c.h.b16 %v1093
    %v1425 = vunpack.c.l.b16 %v1094
    %v1426 = vunpack.c.h.b16 %v1094
    %v1427 = vunpack.c.l.b16 %v1095
    %v1428 = vunpack.c.h.b16 %v1095
    %v1429 = vunpack.c.l.b16 %v1096
    %v1430 = vunpack.c.h.b16 %v1096
    %v1431 = vunpack.c.l.b16 %v1097
    %v1432 = vunpack.c.h.b16 %v1097
    %v1433 = vunpack.c.l.b16 %v1098
    %v1434 = vunpack.c.h.b16 %v1098
    %v1435 = vunpack.c.l.b16 %v1099
    %v1436 = vunpack.c.h.b16 %v1099
    %v1437 = vunpack.c.l.b16 %v1100
    %v1438 = vunpack.c.h.b16 %v1100
    %v1439 = vunpack.c.l.b16 %v1101
    %v1440 = vunpack.c.h.b16 %v1101
    %v1441 = vunpack.c.l.b16 %v1102
    %v1442 = vunpack.c.h.b16 %v1102
    %v1443 = vunpack.c.l.b16 %v1103
    %v1444 = vunpack.c.h.b16 %v1103
    %v1445 = vunpack.c.l.b16 %v1104
    %v1446 = vunpack.c.h.b16 %v1104
    %v1447 = vunpack.c.l.b16 %v1105
    %v1448 = vunpack.c.h.b16 %v1105
    %v1449 = vunpack.c.l.b16 %v1106
    %v1450 = vunpack.c.h.b16 %v1106
    %v1451 = vunpack.c.l.b16 %v1107
    %v1452 = vunpack.c.h.b16 %v1107
    %v1453 = vunpack.c.l.b16 %v1108
    %v1454 = vunpack.c.h.b16 %v1108
    %v1455 = vunpack.c.l.b16 %v1109
    %v1456 = vunpack.c.h.b16 %v1109
    %v1457 = vunpack.c.l.b16 %v1110
    %v1458 = vunpack.c.h.b16 %v1110
    %v1459 = vunpack.c.l.b16 %v1111
    %v1460 = vunpack.c.h.b16 %v1111
    %v1461 = vunpack.c.l.b16 %v1112
    %v1462 = vunpack.c.h.b16 %v1112
    %v1463 = vunpack.c.l.b16 %v1113
    %v1464 = vunpack.c.h.b16 %v1113
    %v1465 = vunpack.c.l.b16 %v1114
    %v1466 = vunpack.c.h.b16 %v1114
    %v1467 = vunpack.c.l.b16 %v1115
    %v1468 = vunpack.c.h.b16 %v1115
    %v1469 = vunpack.c.l.b16 %v1116
    %v1470 = vunpack.c.h.b16 %v1116
    %v1471 = vunpack.c.l.b16 %v1117
    %v1472 = vunpack.c.h.b16 %v1117
    %v1473 = vunpack.c.l.b16 %v1118
    %v1474 = vunpack.c.h.b16 %v1118
    %v1475 = vunpack.c.l.b16 %v1119
    %v1476 = vunpack.c.h.b16 %v1119
    %v1477 = vunpack.c.l.b16 %v1120
    %v1478 = vunpack.c.h.b16 %v1120
    %v1479 = vunpack.c.l.b16 %v1121
    %v1480 = vunpack.c.h.b16 %v1121
    %v1481 = vunpack.c.l.b16 %v1122
    %v1482 = vunpack.c.h.b16 %v1122
    %v1483 = vunpack.c.l.b16 %v1123
    %v1484 = vunpack.c.h.b16 %v1123
    %v1485 = vunpack.c.l.b16 %v1124
    %v1486 = vunpack.c.h.b16 %v1124
    %v1487 = vunpack.c.l.b16 %v1125
    %v1488 = vunpack.c.h.b16 %v1125
    %v1489 = vunpack.c.l.b16 %v1126
    %v1490 = vunpack.c.h.b16 %v1126
    %v1491 = vunpack.c.l.b16 %v1127
    %v1492 = vunpack.c.h.b16 %v1127
    %v1493 = vunpack.c.l.b16 %v1128
    %v1494 = vunpack.c.h.b16 %v1128
    %v1495 = vunpack.c.l.b16 %v1129
    %v1496 = vunpack.c.h.b16 %v1129
    %v1497 = vunpack.c.l.b16 %v1130
    %v1498 = vunpack.c.h.b16 %v1130
    %v1499 = vunpack.c.l.b16 %v1131
    %v1500 = vunpack.c.h.b16 %v1131
    %v1501 = vunpack.c.l.b16 %v1132
    %v1502 = vunpack.c.h.b16 %v1132
    %v1503 = vunpack.c.l.b16 %v1133
    %v1504 = vunpack.c.h.b16 %v1133
    %v1505 = vunpack.c.l.b16 %v1134
    %v1506 = vunpack.c.h.b16 %v1134
    %v1507 = vunpack.c.l.b16 %v1135
    %v1508 = vunpack.c.h.b16 %v1135
    %v1509 = vunpack.c.l.b16 %v1136
    %v1510 = vunpack.c.h.b16 %v1136
    %v1511 = vunpack.c.l.b16 %v1137
    %v1512 = vunpack.c.h.b16 %v1137
    %v1513 = vunpack.c.l.b16 %v1138
    %v1514 = vunpack.c.h.b16 %v1138
    %v1515 = vunpack.c.l.b16 %v1139
    %v1516 = vunpack.c.h.b16 %v1139
    %v1517 = vunpack.c.l.b16 %v1140
    %v1518 = vunpack.c.h.b16 %v1140
    %v1519 = vunpack.c.l.b16 %v1141
    %v1520 = vunpack.c.h.b16 %v1141
    %v1521 = vunpack.c.l.b16 %v1142
    %v1522 = vunpack.c.h.b16 %v1142
    %v1523 = vunpack.c.l.b16 %v1143
    %v1524 = vunpack.c.h.b16 %v1143
    %v1525 = vunpack.c.l.b16 %v1144
    %v1526 = vunpack.c.h.b16 %v1144
    %v1527 = vunpack.c.l.b16 %v1145
    %v1528 = vunpack.c.h.b16 %v1145
    %v1529 = vunpack.c.l.b16 %v1146
    %v1530 = vunpack.c.h.b16 %v1146
    %v1531 = vpack.c.b16 %v1277, %v1275
    %v1532 = vpack.c.b16 %v1278, %v1276
    %v1533 = vpack.c.b16 %v1281, %v1279
    %v1534 = vpack.c.b16 %v1282, %v1280
    %v1535 = vpack.c.b16 %v1285, %v1283
    %v1536 = vpack.c.b16 %v1286, %v1284
    %v1537 = vpack.c.b16 %v1289, %v1287
    %v1538 = vpack.c.b16 %v1290, %v1288
    %v1539 = vpack.c.b16 %v1293, %v1291
    %v1540 = vpack.c.b16 %v1294, %v1292
    %v1541 = vpack.c.b16 %v1297, %v1295
    %v1542 = vpack.c.b16 %v1298, %v1296
    %v1543 = vpack.c.b16 %v1301, %v1299
    %v1544 = vpack.c.b16 %v1302, %v1300
    %v1545 = vpack.c.b16 %v1305, %v1303
    %v1546 = vpack.c.b16 %v1306, %v1304
    %v1547 = vpack.c.b16 %v1309, %v1307
    %v1548 = vpack.c.b16 %v1310, %v1308
    %v1549 = vpack.c.b16 %v1313, %v1311
    %v1550 = vpack.c.b16 %v1314, %v1312
    %v1551 = vpack.c.b16 %v1317, %v1315
    %v1552 = vpack.c.b16 %v1318, %v1316
    %v1553 = vpack.c.b16 %v1321, %v1319
    %v1554 = vpack.c.b16 %v1322, %v1320
    %v1555 = vpack.c.b16 %v1325, %v1323
    %v1556 = vpack.c.b16 %v1326, %v1324
    %v1557 = vpack.c.b16 %v1329, %v1327
    %v1558 = vpack.c.b16 %v1330, %v1328
    %v1559 = vpack.c.b16 %v1333, %v1331
    %v1560 = vpack.c.b16 %v1334, %v1332
    %v1561 = vpack.c.b16 %v1337, %v1335
    %v1562 = vpack.c.b16 %v1338, %v1336
    %v1563 = vpack.c.b16 %v1341, %v1339
    %v1564 = vpack.c.b16 %v1342, %v1340
    %v1565 = vpack.c.b16 %v1345, %v1343
    %v1566 = vpack.c.b16 %v1346, %v1344
    %v1567 = vpack.c.b16 %v1349, %v1347
    %v1568 = vpack.c.b16 %v1350, %v1348
    %v1569 = vpack.c.b16 %v1353, %v1351
    %v1570 = vpack.c.b16 %v1354, %v1352
    %v1571 = vpack.c.b16 %v1357, %v1355
    %v1572 = vpack.c.b16 %v1358, %v1356
    %v1573 = vpack.c.b16 %v1361, %v1359
    %v1574 = vpack.c.b16 %v1362, %v1360
    %v1575 = vpack.c.b16 %v1365, %v1363
    %v1576 = vpack.c.b16 %v1366, %v1364
    %v1577 = vpack.c.b16 %v1369, %v1367
    %v1578 = vpack.c.b16 %v1370, %v1368
    %v1579 = vpack.c.b16 %v1373, %v1371
    %v1580 = vpack.c.b16 %v1374, %v1372
    %v1581 = vpack.c.b16 %v1377, %v1375
    %v1582 = vpack.c.b16 %v1378, %v1376
    %v1583 = vpack.c.b16 %v1381, %v1379
    %v1584 = vpack.c.b16 %v1382, %v1380
    %v1585 = vpack.c.b16 %v1385, %v1383
    %v1586 = vpack.c.b16 %v1386, %v1384
    %v1587 = vpack.c.b16 %v1389, %v1387
    %v1588 = vpack.c.b16 %v1390, %v1388
    %v1589 = vpack.c.b16 %v1393, %v1391
    %v1590 = vpack.c.b16 %v1394, %v1392
    %v1591 = vpack.c.b16 %v1397, %v1395
    %v1592 = vpack.c.b16 %v1398, %v1396
    %v1593 = vpack.c.b16 %v1401, %v1399
    %v1594 = vpack.c.b16 %v1402, %v1400
    %v1595 = vpack.c.b16 %v1405, %v1403
    %v1596 = vpack.c.b16 %v1406, %v1404
    %v1597 = vpack.c.b16 %v1409, %v1407
    %v1598 = vpack.c.b16 %v1410, %v1408
    %v1599 = vpack.c.b16 %v1413, %v1411
    %v1600 = vpack.c.b16 %v1414, %v1412
    %v1601 = vpack.c.b16 %v1417, %v1415
    %v1602 = vpack.c.b16 %v1418, %v1416
    %v1603 = vpack.c.b16 %v1421, %v1419
    %v1604 = vpack.c.b16 %v1422, %v1420
    %v1605 = vpack.c.b16 %v1425, %v1423
    %v1606 = vpack.c.b16 %v1426, %v1424
    %v1607 = vpack.c.b16 %v1429, %v1427
    %v1608 = vpack.c.b16 %v1430, %v1428
    %v1609 = vpack.c.b16 %v1433, %v1431
    %v1610 = vpack.c.b16 %v1434, %v1432
    %v1611 = vpack.c.b16 %v1437, %v1435
    %v1612 = vpack.c.b16 %v1438, %v1436
    %v1613 = vpack.c.b16 %v1441, %v1439
    %v1614 = vpack.c.b16 %v1442, %v1440
    %v1615 = vpack.c.b16 %v1445, %v1443
    %v1616 = vpack.c.b16 %v1446, %v1444
    %v1617 = vpack.c.b16 %v1449, %v1447
    %v1618 = vpack.c.b16 %v1450, %v1448
    %v1619 = vpack.c.b16 %v1453, %v1451
    %v1620 = vpack.c.b16 %v1454, %v1452
    %v1621 = vpack.c.b16 %v1457, %v1455
    %v1622 = vpack.c.b16 %v1458, %v1456
    %v1623 = vpack.c.b16 %v1461, %v1459
    %v1624 = vpack.c.b16 %v1462, %v1460
    %v1625 = vpack.c.b16 %v1465, %v1463
    %v1626 = vpack.c.b16 %v1466, %v1464
    %v1627 = vpack.c.b16 %v1469, %v1467
    %v1628 = vpack.c.b16 %v1470, %v1468
    %v1629 = vpack.c.b16 %v1473, %v1471
    %v1630 = vpack.c.b16 %v1474, %v1472
    %v1631 = vpack.c.b16 %v1477, %v1475
    %v1632 = vpack.c.b16 %v1478, %v1476
    %v1633 = vpack.c.b16 %v1481, %v1479
    %v1634 = vpack.c.b16 %v1482, %v1480
    %v1635 = vpack.c.b16 %v1485, %v1483
    %v1636 = vpack.c.b16 %v1486, %v1484
    %v1637 = vpack.c.b16 %v1489, %v1487
    %v1638 = vpack.c.b16 %v1490, %v1488
    %v1639 = vpack.c.b16 %v1493, %v1491
    %v1640 = vpack.c.b16 %v1494, %v1492
    %v1641 = vpack.c.b16 %v1497, %v1495
    %v1642 = vpack.c.b16 %v1498, %v1496
    %v1643 = vpack.c.b16 %v1501, %v1499
    %v1644 = vpack.c.b16 %v1502, %v1500
    %v1645 = vpack.c.b16 %v1505, %v1503
    %v1646 = vpack.c.b16 %v1506, %v1504
    %v1647 = vpack.c.b16 %v1509, %v1507
    %v1648 = vpack.c.b16 %v1510, %v1508
    %v1649 = vpack.c.b16 %v1513, %v1511
    %v1650 = vpack.c.b16 %v1514, %v1512
    %v1651 = vpack.c.b16 %v1517, %v1515
    %v1652 = vpack.c.b16 %v1518, %v1516
    %v1653 = vpack.c.b16 %v1521, %v1519
    %v1654 = vpack.c.b16 %v1522, %v1520
    %v1655 = vpack.c.b16 %v1525, %v1523
    %v1656 = vpack.c.b16 %v1526, %v1524
    %v1657 = vpack.c.b16 %v1529, %v1527
    %v1658 = vpack.c.b16 %v1530, %v1528
    %1787 = vmatprep.subr.bf16.mxu0 %v1546
    %1788 = vmatpush1.bf16.msra.mxu0 %v1545
    %1789 = vmatprep.subr.bf16.mxu0 %v1544
    %1790 = vmatpush1.bf16.msra.mxu0 %v1543
    %1791 = vmatprep.subr.bf16.mxu0 %v1542
    %1792 = vmatpush1.bf16.msra.mxu0 %v1541
    %1793 = vmatprep.subr.bf16.mxu0 %v1540
    %1794 = vmatpush1.bf16.msra.mxu0 %v1539
    %1795 = vmatprep.subr.bf16.mxu0 %v1538
    %1796 = vmatpush1.bf16.msra.mxu0 %v1537
    %1797 = vmatprep.subr.bf16.mxu0 %v1536
    %1798 = vmatpush1.bf16.msra.mxu0 %v1535
    %1799 = vmatprep.subr.bf16.mxu0 %v1534
    %1800 = vmatpush1.bf16.msra.mxu0 %v1533
    %1801 = vmatprep.subr.bf16.mxu0 %v1532
    %1802 = vmatpush1.bf16.msra.mxu0 %v1531
    %1803 = vmatprep.subr.bf16.mxu0 %v1562
    %1804 = vmatpush2.bf16.msra.mxu0 %v1561
    %1805 = vmatprep.subr.bf16.mxu0 %v1560
    %1806 = vmatpush2.bf16.msra.mxu0 %v1559
    %1807 = vmatprep.subr.bf16.mxu0 %v1558
    %1808 = vmatpush2.bf16.msra.mxu0 %v1557
    %1809 = vmatprep.subr.bf16.mxu0 %v1556
    %1810 = vmatpush2.bf16.msra.mxu0 %v1555
    %1811 = vmatprep.subr.bf16.mxu0 %v1554
    %1812 = vmatpush2.bf16.msra.mxu0 %v1553
    %1813 = vmatprep.subr.bf16.mxu0 %v1552
    %1814 = vmatpush2.bf16.msra.mxu0 %v1551
    %1815 = vmatprep.subr.bf16.mxu0 %v1550
    %1816 = vmatpush2.bf16.msra.mxu0 %v1549
    %1817 = vmatprep.subr.bf16.mxu0 %v1548
    %1818 = vmatpush2.bf16.msra.mxu0 %v1547
    %1819 = vmatprep.mubr.bf16.mxu0 %v1008
    %1820 = vmatmul.mubr.bf16.gmra.mxu0 %v1007
    %v1821 = vpop.f32.mrf.mxu0
    %v1822 = vadd.f32 0.0, %v1821
    %v1823 = vpop.f32.mrf.mxu0
    %v1824 = vadd.f32 0.0, %v1823
    %v1825 = vpop.f32.mrf.mxu0
    %v1826 = vadd.f32 0.0, %v1825
    %v1827 = vpop.f32.mrf.mxu0
    %v1828 = vadd.f32 0.0, %v1827
    %1829 = vdwg.mxu0
    %1830 = vmatprep.subr.bf16.mxu0 %v1578
    %1831 = vmatpush1.bf16.msra.mxu0 %v1577
    %1832 = vmatprep.subr.bf16.mxu0 %v1576
    %1833 = vmatpush1.bf16.msra.mxu0 %v1575
    %1834 = vmatprep.subr.bf16.mxu0 %v1574
    %1835 = vmatpush1.bf16.msra.mxu0 %v1573
    %1836 = vmatprep.subr.bf16.mxu0 %v1572
    %1837 = vmatpush1.bf16.msra.mxu0 %v1571
    %1838 = vmatprep.subr.bf16.mxu0 %v1570
    %1839 = vmatpush1.bf16.msra.mxu0 %v1569
    %1840 = vmatprep.subr.bf16.mxu0 %v1568
    %1841 = vmatpush1.bf16.msra.mxu0 %v1567
    %1842 = vmatprep.subr.bf16.mxu0 %v1566
    %1843 = vmatpush1.bf16.msra.mxu0 %v1565
    %1844 = vmatprep.subr.bf16.mxu0 %v1564
    %1845 = vmatpush1.bf16.msra.mxu0 %v1563
    %1846 = vmatprep.subr.bf16.mxu0 %v1594
    %1847 = vmatpush2.bf16.msra.mxu0 %v1593
    %1848 = vmatprep.subr.bf16.mxu0 %v1592
    %1849 = vmatpush2.bf16.msra.mxu0 %v1591
    %1850 = vmatprep.subr.bf16.mxu0 %v1590
    %1851 = vmatpush2.bf16.msra.mxu0 %v1589
    %1852 = vmatprep.subr.bf16.mxu0 %v1588
    %1853 = vmatpush2.bf16.msra.mxu0 %v1587
    %1854 = vmatprep.subr.bf16.mxu0 %v1586
    %1855 = vmatpush2.bf16.msra.mxu0 %v1585
    %1856 = vmatprep.subr.bf16.mxu0 %v1584
    %1857 = vmatpush2.bf16.msra.mxu0 %v1583
    %1858 = vmatprep.subr.bf16.mxu0 %v1582
    %1859 = vmatpush2.bf16.msra.mxu0 %v1581
    %1860 = vmatprep.subr.bf16.mxu0 %v1580
    %1861 = vmatpush2.bf16.msra.mxu0 %v1579
    %1862 = vmatprep.mubr.bf16.mxu0 %v1010
    %1863 = vmatmul.mubr.bf16.gmra.mxu0 %v1009
    %v1864 = vpop.f32.mrf.mxu0
    %v1865 = vadd.f32 %v1822, %v1864
    %v1866 = vpop.f32.mrf.mxu0
    %v1867 = vadd.f32 %v1824, %v1866
    %v1868 = vpop.f32.mrf.mxu0
    %v1869 = vadd.f32 %v1826, %v1868
    %v1870 = vpop.f32.mrf.mxu0
    %v1871 = vadd.f32 %v1828, %v1870
    %1872 = vdwg.mxu0
    %1873 = vmatprep.subr.bf16.mxu0 %v1610
    %1874 = vmatpush1.bf16.msra.mxu0 %v1609
    %1875 = vmatprep.subr.bf16.mxu0 %v1608
    %1876 = vmatpush1.bf16.msra.mxu0 %v1607
    %1877 = vmatprep.subr.bf16.mxu0 %v1606
    %1878 = vmatpush1.bf16.msra.mxu0 %v1605
    %1879 = vmatprep.subr.bf16.mxu0 %v1604
    %1880 = vmatpush1.bf16.msra.mxu0 %v1603
    %1881 = vmatprep.subr.bf16.mxu0 %v1602
    %1882 = vmatpush1.bf16.msra.mxu0 %v1601
    %1883 = vmatprep.subr.bf16.mxu0 %v1600
    %1884 = vmatpush1.bf16.msra.mxu0 %v1599
    %1885 = vmatprep.subr.bf16.mxu0 %v1598
    %1886 = vmatpush1.bf16.msra.mxu0 %v1597
    %1887 = vmatprep.subr.bf16.mxu0 %v1596
    %1888 = vmatpush1.bf16.msra.mxu0 %v1595
    %1889 = vmatprep.subr.bf16.mxu0 %v1626
    %1890 = vmatpush2.bf16.msra.mxu0 %v1625
    %1891 = vmatprep.subr.bf16.mxu0 %v1624
    %1892 = vmatpush2.bf16.msra.mxu0 %v1623
    %1893 = vmatprep.subr.bf16.mxu0 %v1622
    %1894 = vmatpush2.bf16.msra.mxu0 %v1621
    %1895 = vmatprep.subr.bf16.mxu0 %v1620
    %1896 = vmatpush2.bf16.msra.mxu0 %v1619
    %1897 = vmatprep.subr.bf16.mxu0 %v1618
    %1898 = vmatpush2.bf16.msra.mxu0 %v1617
    %1899 = vmatprep.subr.bf16.mxu0 %v1616
    %1900 = vmatpush2.bf16.msra.mxu0 %v1615
    %1901 = vmatprep.subr.bf16.mxu0 %v1614
    %1902 = vmatpush2.bf16.msra.mxu0 %v1613
    %1903 = vmatprep.subr.bf16.mxu0 %v1612
    %1904 = vmatpush2.bf16.msra.mxu0 %v1611
    %1905 = vmatprep.mubr.bf16.mxu0 %v1012
    %1906 = vmatmul.mubr.bf16.gmra.mxu0 %v1011
    %v1907 = vpop.f32.mrf.mxu0
    %v1908 = vadd.f32 %v1865, %v1907
    %v1909 = vpop.f32.mrf.mxu0
    %v1910 = vadd.f32 %v1867, %v1909
    %v1911 = vpop.f32.mrf.mxu0
    %v1912 = vadd.f32 %v1869, %v1911
    %v1913 = vpop.f32.mrf.mxu0
    %v1914 = vadd.f32 %v1871, %v1913
    %1915 = vdwg.mxu0
    %1916 = vmatprep.subr.bf16.mxu0 %v1642
    %1917 = vmatpush1.bf16.msra.mxu0 %v1641
    %1918 = vmatprep.subr.bf16.mxu0 %v1640
    %1919 = vmatpush1.bf16.msra.mxu0 %v1639
    %1920 = vmatprep.subr.bf16.mxu0 %v1638
    %1921 = vmatpush1.bf16.msra.mxu0 %v1637
    %1922 = vmatprep.subr.bf16.mxu0 %v1636
    %1923 = vmatpush1.bf16.msra.mxu0 %v1635
    %1924 = vmatprep.subr.bf16.mxu0 %v1634
    %1925 = vmatpush1.bf16.msra.mxu0 %v1633
    %1926 = vmatprep.subr.bf16.mxu0 %v1632
    %1927 = vmatpush1.bf16.msra.mxu0 %v1631
    %1928 = vmatprep.subr.bf16.mxu0 %v1630
    %1929 = vmatpush1.bf16.msra.mxu0 %v1629
    %1930 = vmatprep.subr.bf16.mxu0 %v1628
    %1931 = vmatpush1.bf16.msra.mxu0 %v1627
    %1932 = vmatprep.subr.bf16.mxu0 %v1658
    %1933 = vmatpush2.bf16.msra.mxu0 %v1657
    %1934 = vmatprep.subr.bf16.mxu0 %v1656
    %1935 = vmatpush2.bf16.msra.mxu0 %v1655
    %1936 = vmatprep.subr.bf16.mxu0 %v1654
    %1937 = vmatpush2.bf16.msra.mxu0 %v1653
    %1938 = vmatprep.subr.bf16.mxu0 %v1652
    %1939 = vmatpush2.bf16.msra.mxu0 %v1651
    %1940 = vmatprep.subr.bf16.mxu0 %v1650
    %1941 = vmatpush2.bf16.msra.mxu0 %v1649
    %1942 = vmatprep.subr.bf16.mxu0 %v1648
    %1943 = vmatpush2.bf16.msra.mxu0 %v1647
    %1944 = vmatprep.subr.bf16.mxu0 %v1646
    %1945 = vmatpush2.bf16.msra.mxu0 %v1645
    %1946 = vmatprep.subr.bf16.mxu0 %v1644
    %1947 = vmatpush2.bf16.msra.mxu0 %v1643
    %1948 = vmatprep.mubr.bf16.mxu0 %v1014
    %1949 = vmatmul.mubr.bf16.gmra.mxu0 %v1013
    %v1950 = vpop.f32.mrf.mxu0
    %v1951 = vadd.f32 %v1908, %v1950
    %v1952 = vpop.f32.mrf.mxu0
    %v1953 = vadd.f32 %v1910, %v1952
    %v1954 = vpop.f32.mrf.mxu0
    %v1955 = vadd.f32 %v1912, %v1954
    %v1956 = vpop.f32.mrf.mxu0
    %v1957 = vadd.f32 %v1914, %v1956
    %1958 = vdwg.mxu0
    %v1959 = vsel %vm971, %v1955, 0.0
    %v1960 = vadd.f32 %v1951, %v1959
    %v1961 = vrot.slane %v1960, 4
    %v1962 = vadd.f32 %v1960, %v1961
    %v1963 = vrot.slane %v1962, 2
    %v1964 = vadd.f32 %v1962, %v1963
    %v1965 = vrot.slane %v1964, 1
    %v1966 = vadd.f32 %v1964, %v1965
    %v1967 = vsel %vm607, %v1953, 0.0
    %vm1968 = vcmask 519168
    %v1969 = vsel %vm1968, %v1957, 0.0
    %v1970 = vadd.f32 %v1967, %v1969
    %v1971 = vrot.slane %v1970, 4
    %v1972 = vadd.f32 %v1970, %v1971
    %v1973 = vrot.slane %v1972, 2
    %v1974 = vadd.f32 %v1972, %v1973
    %v1975 = vrot.slane %v1974, 1
    %v1976 = vadd.f32 %v1974, %v1975
    %v1977 = vmul.f32 %v1951, %v1951
    %v1978 = vmul.f32 %v1953, %v1953
    %v1979 = vmul.f32 %v1955, %v1955
    %v1980 = vmul.f32 %v1957, %v1957
    %v1981 = vsel %vm971, %v1979, 0.0
    %v1982 = vadd.f32 %v1977, %v1981
    %v1983 = vrot.slane %v1982, 4
    %v1984 = vadd.f32 %v1982, %v1983
    %v1985 = vrot.slane %v1984, 2
    %v1986 = vadd.f32 %v1984, %v1985
    %v1987 = vrot.slane %v1986, 1
    %v1988 = vadd.f32 %v1986, %v1987
    %v1989 = vsel %vm607, %v1978, 0.0
    %v1990 = vsel %vm1968, %v1980, 0.0
    %v1991 = vadd.f32 %v1989, %v1990
    %v1992 = vrot.slane %v1991, 4
    %v1993 = vadd.f32 %v1991, %v1992
    %v1994 = vrot.slane %v1993, 2
    %v1995 = vadd.f32 %v1993, %v1994
    %v1996 = vrot.slane %v1995, 1
    %v1997 = vadd.f32 %v1995, %v1996
    %v1998 = vadd.s32 %v541, 8
    %v1999 = vadd.s32 %v541, 16
    %v2000 = vadd.s32 %v541, 24
    %vm2001 = vcmp.eq.s32.totalorder %v1998, %v543
    %vm2002 = vcmp.eq.s32.totalorder %v1999, %v543
    %vm2003 = vcmp.eq.s32.totalorder %v2000, %v543
    %v2004 = vsel %vm2001, 1, 0
    %v2005 = vsel %vm2002, 1, 0
    %v2006 = vsel %vm2003, 1, 0
    %v2007 = vcvt.s32.f32 %v2004
    %v2008 = vcvt.s32.f32 %v2005
    %v2009 = vcvt.s32.f32 %v2006
    %2013 = vrot.lane.b32.xlu0 %v2007, 32
    %v2014 = vpop.permute.xlu0 %2013
    %2015 = vrot.lane.b32.xlu0 %v2008, 32
    %v2016 = vpop.permute.xlu0 %2015
    %2017 = vrot.lane.b32.xlu0 %v2009, 32
    %v2018 = vpop.permute.xlu0 %2017
    %2022 = vrot.lane.b32.xlu0 %v2007, 64
    %v2023 = vpop.permute.xlu0 %2022
    %2024 = vrot.lane.b32.xlu0 %v2008, 64
    %v2025 = vpop.permute.xlu0 %2024
    %2026 = vrot.lane.b32.xlu0 %v2009, 64
    %v2027 = vpop.permute.xlu0 %2026
    %2031 = vrot.lane.b32.xlu0 %v2007, 96
    %v2032 = vpop.permute.xlu0 %2031
    %2033 = vrot.lane.b32.xlu0 %v2008, 96
    %v2034 = vpop.permute.xlu0 %2033
    %2035 = vrot.lane.b32.xlu0 %v2009, 96
    %v2036 = vpop.permute.xlu0 %2035
    %v2040 = vsel %vm599, %v546, %v558
    %v2041 = vsel %vm599, %v2007, %v2014
    %v2042 = vsel %vm599, %v2008, %v2016
    %v2043 = vsel %vm599, %v2009, %v2018
    %v2044 = vsel %vm607, %v2040, %v570
    %v2045 = vsel %vm607, %v2041, %v2023
    %v2046 = vsel %vm607, %v2042, %v2025
    %v2047 = vsel %vm607, %v2043, %v2027
    %v2048 = vsel %vm615, %v2044, %v582
    %v2049 = vsel %vm615, %v2045, %v2032
    %v2050 = vsel %vm615, %v2046, %v2034
    %v2051 = vsel %vm615, %v2047, %v2036
    %v2053 = vsel %vm607, %v1976, 0
    %2055 = vmatprep.subr.mxu0 0.0
    %2056 = vmatpush1.msra.mxu0 %v2009
    %2057 = vmatprep.subr.mxu0 0.0
    %2058 = vmatpush1.msra.mxu0 %v2008
    %2059 = vmatprep.subr.mxu0 0.0
    %2060 = vmatpush1.msra.mxu0 %v2007
    %2061 = vmatprep.subr.mxu0 0.0
    %2062 = vmatpush1.msra.mxu0 %v546
    %2063 = vmatprep.subr.mxu0 0.0
    %2064 = vmatpush1.msra.mxu0 %v2009
    %2065 = vmatprep.subr.mxu0 0.0
    %2066 = vmatpush1.msra.mxu0 %v2008
    %2067 = vmatprep.subr.mxu0 0.0
    %2068 = vmatpush1.msra.mxu0 %v2007
    %2069 = vmatprep.subr.mxu0 0.0
    %2070 = vmatpush1.msra.mxu0 %v546
    %2071 = vmatprep.subr.mxu0 0.0
    %2072 = vmatpush1.msra.mxu0 %v2009
    %2073 = vmatprep.subr.mxu0 0.0
    %2074 = vmatpush1.msra.mxu0 %v2008
    %2075 = vmatprep.subr.mxu0 0.0
    %2076 = vmatpush1.msra.mxu0 %v2007
    %2077 = vmatprep.subr.mxu0 0.0
    %2078 = vmatpush1.msra.mxu0 %v546
    %2079 = vmatprep.subr.mxu0 0.0
    %2080 = vmatpush1.msra.mxu0 %v2009
    %2081 = vmatprep.subr.mxu0 0.0
    %2082 = vmatpush1.msra.mxu0 %v2008
    %2083 = vmatprep.subr.mxu0 0.0
    %2084 = vmatpush1.msra.mxu0 %v2007
    %2085 = vmatprep.subr.mxu0 0.0
    %2086 = vmatpush1.msra.mxu0 %v546
    %2087 = vmatprep.subr.mxu0 0.0
    %2088 = vmatpush2.msra.mxu0 0.0
    %2089 = vmatprep.subr.mxu0 0.0
    %2090 = vmatpush2.msra.mxu0 0.0
    %2091 = vmatprep.subr.mxu0 0.0
    %2092 = vmatpush2.msra.mxu0 0.0
    %2093 = vmatprep.subr.mxu0 0.0
    %2094 = vmatpush2.msra.mxu0 0.0
    %2095 = vmatprep.subr.mxu0 0.0
    %2096 = vmatpush2.msra.mxu0 0.0
    %2097 = vmatprep.subr.mxu0 0.0
    %2098 = vmatpush2.msra.mxu0 0.0
    %2099 = vmatprep.subr.mxu0 0.0
    %2100 = vmatpush2.msra.mxu0 0.0
    %2101 = vmatprep.subr.mxu0 0.0
    %2102 = vmatpush2.msra.mxu0 0.0
    %2103 = vmatprep.subr.mxu0 0.0
    %2104 = vmatpush2.msra.mxu0 %v2009
    %2105 = vmatprep.subr.mxu0 0.0
    %2106 = vmatpush2.msra.mxu0 %v2008
    %2107 = vmatprep.subr.mxu0 0.0
    %2108 = vmatpush2.msra.mxu0 %v2007
    %2109 = vmatprep.subr.mxu0 0.0
    %2110 = vmatpush2.msra.mxu0 %v546
    %2111 = vmatprep.subr.mxu0 0.0
    %2112 = vmatpush2.msra.mxu0 %v2009
    %2113 = vmatprep.subr.mxu0 0.0
    %2114 = vmatpush2.msra.mxu0 %v2008
    %2115 = vmatprep.subr.mxu0 0.0
    %2116 = vmatpush2.msra.mxu0 %v2007
    %2117 = vmatprep.subr.mxu0 0.0
    %2118 = vmatpush2.msra.mxu0 %v546
    %2119 = vmatprep.mubr.f32.mxu0 %v2053
    %2120 = vmatmul.mubr.f32.gmra.mxu0 %v1966
    %v2121 = vpop.f32.mrf.mxu0
    %v2122 = vadd.f32 0.0, %v2121
    %v2123 = vpop.f32.mrf.mxu0
    %2124 = vdwg.mxu0
    %v2125 = vmul.f32 %v2122, 0.013888889
    %v2127 = vsel %vm607, %v1997, 0
    %2129 = vmatprep.subr.mxu0 0.0
    %2130 = vmatpush1.msra.mxu0 %v2009
    %2131 = vmatprep.subr.mxu0 0.0
    %2132 = vmatpush1.msra.mxu0 %v2008
    %2133 = vmatprep.subr.mxu0 0.0
    %2134 = vmatpush1.msra.mxu0 %v2007
    %2135 = vmatprep.subr.mxu0 0.0
    %2136 = vmatpush1.msra.mxu0 %v546
    %2137 = vmatprep.subr.mxu0 0.0
    %2138 = vmatpush1.msra.mxu0 %v2009
    %2139 = vmatprep.subr.mxu0 0.0
    %2140 = vmatpush1.msra.mxu0 %v2008
    %2141 = vmatprep.subr.mxu0 0.0
    %2142 = vmatpush1.msra.mxu0 %v2007
    %2143 = vmatprep.subr.mxu0 0.0
    %2144 = vmatpush1.msra.mxu0 %v546
    %2145 = vmatprep.subr.mxu0 0.0
    %2146 = vmatpush1.msra.mxu0 %v2009
    %2147 = vmatprep.subr.mxu0 0.0
    %2148 = vmatpush1.msra.mxu0 %v2008
    %2149 = vmatprep.subr.mxu0 0.0
    %2150 = vmatpush1.msra.mxu0 %v2007
    %2151 = vmatprep.subr.mxu0 0.0
    %2152 = vmatpush1.msra.mxu0 %v546
    %2153 = vmatprep.subr.mxu0 0.0
    %2154 = vmatpush1.msra.mxu0 %v2009
    %2155 = vmatprep.subr.mxu0 0.0
    %2156 = vmatpush1.msra.mxu0 %v2008
    %2157 = vmatprep.subr.mxu0 0.0
    %2158 = vmatpush1.msra.mxu0 %v2007
    %2159 = vmatprep.subr.mxu0 0.0
    %2160 = vmatpush1.msra.mxu0 %v546
    %2161 = vmatprep.subr.mxu0 0.0
    %2162 = vmatpush2.msra.mxu0 0.0
    %2163 = vmatprep.subr.mxu0 0.0
    %2164 = vmatpush2.msra.mxu0 0.0
    %2165 = vmatprep.subr.mxu0 0.0
    %2166 = vmatpush2.msra.mxu0 0.0
    %2167 = vmatprep.subr.mxu0 0.0
    %2168 = vmatpush2.msra.mxu0 0.0
    %2169 = vmatprep.subr.mxu0 0.0
    %2170 = vmatpush2.msra.mxu0 0.0
    %2171 = vmatprep.subr.mxu0 0.0
    %2172 = vmatpush2.msra.mxu0 0.0
    %2173 = vmatprep.subr.mxu0 0.0
    %2174 = vmatpush2.msra.mxu0 0.0
    %2175 = vmatprep.subr.mxu0 0.0
    %2176 = vmatpush2.msra.mxu0 0.0
    %2177 = vmatprep.subr.mxu0 0.0
    %2178 = vmatpush2.msra.mxu0 %v2009
    %2179 = vmatprep.subr.mxu0 0.0
    %2180 = vmatpush2.msra.mxu0 %v2008
    %2181 = vmatprep.subr.mxu0 0.0
    %2182 = vmatpush2.msra.mxu0 %v2007
    %2183 = vmatprep.subr.mxu0 0.0
    %2184 = vmatpush2.msra.mxu0 %v546
    %2185 = vmatprep.subr.mxu0 0.0
    %2186 = vmatpush2.msra.mxu0 %v2009
    %2187 = vmatprep.subr.mxu0 0.0
    %2188 = vmatpush2.msra.mxu0 %v2008
    %2189 = vmatprep.subr.mxu0 0.0
    %2190 = vmatpush2.msra.mxu0 %v2007
    %2191 = vmatprep.subr.mxu0 0.0
    %2192 = vmatpush2.msra.mxu0 %v546
    %2193 = vmatprep.mubr.f32.mxu0 %v2127
    %2194 = vmatmul.mubr.f32.gmra.mxu0 %v1988
    %v2195 = vpop.f32.mrf.mxu0
    %v2196 = vadd.f32 0.0, %v2195
    %v2197 = vpop.f32.mrf.mxu0
    %2198 = vdwg.mxu0
    %v2199 = vmul.f32 %v2196, 0.013888889
    %v2200 = vmul.f32 %v2125, %v2125
    %v2201 = vsub.f32 %v2199, %v2200
    %v2202 = vld [vmem:[%s2 + $0x2] sm:$0x1]
    %v2203 = vld [vmem:[%s2 + $0x3] sm:$0x1]
    %v2204 = vadd.f32 %v2201, 1e-05
    %v2205 = vrsqrt.pop %v2204
    %v2206 = vmul.f32 %v2202, %v2205
    %v2207 = vmul.f32 %v2125, %v2206
    %v2208 = vsub.f32 %v2203, %v2207
    %v2210 = vsel %vm599, %v2206, 0
    %2212 = vmatprep.subr.mxu0 0.0
    %2213 = vmatpush1.msra.mxu0 0.0
    %2214 = vmatprep.subr.mxu0 0.0
    %2215 = vmatpush1.msra.mxu0 0.0
    %2216 = vmatprep.subr.mxu0 0.0
    %2217 = vmatpush1.msra.mxu0 0.0
    %2218 = vmatprep.subr.mxu0 0.0
    %2219 = vmatpush1.msra.mxu0 0.0
    %2220 = vmatprep.subr.mxu0 0.0
    %2221 = vmatpush1.msra.mxu0 0.0
    %2222 = vmatprep.subr.mxu0 0.0
    %2223 = vmatpush1.msra.mxu0 0.0
    %2224 = vmatprep.subr.mxu0 0.0
    %2225 = vmatpush1.msra.mxu0 0.0
    %2226 = vmatprep.subr.mxu0 0.0
    %2227 = vmatpush1.msra.mxu0 0.0
    %2228 = vmatprep.subr.mxu0 0.0
    %2229 = vmatpush1.msra.mxu0 0.0
    %2230 = vmatprep.subr.mxu0 0.0
    %2231 = vmatpush1.msra.mxu0 0.0
    %2232 = vmatprep.subr.mxu0 0.0
    %2233 = vmatpush1.msra.mxu0 0.0
    %2234 = vmatprep.subr.mxu0 0.0
    %2235 = vmatpush1.msra.mxu0 0.0
    %2236 = vmatprep.subr.mxu0 %v2043
    %2237 = vmatpush1.msra.mxu0 %v2051
    %2238 = vmatprep.subr.mxu0 %v2042
    %2239 = vmatpush1.msra.mxu0 %v2050
    %2240 = vmatprep.subr.mxu0 %v2041
    %2241 = vmatpush1.msra.mxu0 %v2049
    %2242 = vmatprep.subr.mxu0 %v2040
    %2243 = vmatpush1.msra.mxu0 %v2048
    %2244 = vmatprep.subr.mxu0 0.0
    %2245 = vmatpush2.msra.mxu0 0.0
    %2246 = vmatprep.subr.mxu0 0.0
    %2247 = vmatpush2.msra.mxu0 0.0
    %2248 = vmatprep.subr.mxu0 0.0
    %2249 = vmatpush2.msra.mxu0 0.0
    %2250 = vmatprep.subr.mxu0 0.0
    %2251 = vmatpush2.msra.mxu0 0.0
    %2252 = vmatprep.subr.mxu0 0.0
    %2253 = vmatpush2.msra.mxu0 0.0
    %2254 = vmatprep.subr.mxu0 0.0
    %2255 = vmatpush2.msra.mxu0 0.0
    %2256 = vmatprep.subr.mxu0 0.0
    %2257 = vmatpush2.msra.mxu0 0.0
    %2258 = vmatprep.subr.mxu0 0.0
    %2259 = vmatpush2.msra.mxu0 0.0
    %2260 = vmatprep.subr.mxu0 0.0
    %2261 = vmatpush2.msra.mxu0 0.0
    %2262 = vmatprep.subr.mxu0 0.0
    %2263 = vmatpush2.msra.mxu0 0.0
    %2264 = vmatprep.subr.mxu0 0.0
    %2265 = vmatpush2.msra.mxu0 0.0
    %2266 = vmatprep.subr.mxu0 0.0
    %2267 = vmatpush2.msra.mxu0 0.0
    %2268 = vmatprep.subr.mxu0 0.0
    %2269 = vmatpush2.msra.mxu0 0.0
    %2270 = vmatprep.subr.mxu0 0.0
    %2271 = vmatpush2.msra.mxu0 0.0
    %2272 = vmatprep.subr.mxu0 0.0
    %2273 = vmatpush2.msra.mxu0 0.0
    %2274 = vmatprep.subr.mxu0 0.0
    %2275 = vmatpush2.msra.mxu0 0.0
    %2276 = vmatprep.mubr.f32.mxu0 0.0
    %2277 = vmatmul.mubr.f32.gmra.mxu0 %v2210
    %v2278 = vpop.f32.mrf.mxu0
    %v2279 = vadd.f32 0.0, %v2278
    %v2280 = vpop.f32.mrf.mxu0
    %v2281 = vadd.f32 0.0, %v2280
    %2282 = vdwg.mxu0
    %v2284 = vsel %vm599, %v2208, 0
    %2286 = vmatprep.subr.mxu0 0.0
    %2287 = vmatpush1.msra.mxu0 0.0
    %2288 = vmatprep.subr.mxu0 0.0
    %2289 = vmatpush1.msra.mxu0 0.0
    %2290 = vmatprep.subr.mxu0 0.0
    %2291 = vmatpush1.msra.mxu0 0.0
    %2292 = vmatprep.subr.mxu0 0.0
    %2293 = vmatpush1.msra.mxu0 0.0
    %2294 = vmatprep.subr.mxu0 0.0
    %2295 = vmatpush1.msra.mxu0 0.0
    %2296 = vmatprep.subr.mxu0 0.0
    %2297 = vmatpush1.msra.mxu0 0.0
    %2298 = vmatprep.subr.mxu0 0.0
    %2299 = vmatpush1.msra.mxu0 0.0
    %2300 = vmatprep.subr.mxu0 0.0
    %2301 = vmatpush1.msra.mxu0 0.0
    %2302 = vmatprep.subr.mxu0 0.0
    %2303 = vmatpush1.msra.mxu0 0.0
    %2304 = vmatprep.subr.mxu0 0.0
    %2305 = vmatpush1.msra.mxu0 0.0
    %2306 = vmatprep.subr.mxu0 0.0
    %2307 = vmatpush1.msra.mxu0 0.0
    %2308 = vmatprep.subr.mxu0 0.0
    %2309 = vmatpush1.msra.mxu0 0.0
    %2310 = vmatprep.subr.mxu0 %v2043
    %2311 = vmatpush1.msra.mxu0 %v2051
    %2312 = vmatprep.subr.mxu0 %v2042
    %2313 = vmatpush1.msra.mxu0 %v2050
    %2314 = vmatprep.subr.mxu0 %v2041
    %2315 = vmatpush1.msra.mxu0 %v2049
    %2316 = vmatprep.subr.mxu0 %v2040
    %2317 = vmatpush1.msra.mxu0 %v2048
    %2318 = vmatprep.subr.mxu0 0.0
    %2319 = vmatpush2.msra.mxu0 0.0
    %2320 = vmatprep.subr.mxu0 0.0
    %2321 = vmatpush2.msra.mxu0 0.0
    %2322 = vmatprep.subr.mxu0 0.0
    %2323 = vmatpush2.msra.mxu0 0.0
    %2324 = vmatprep.subr.mxu0 0.0
    %2325 = vmatpush2.msra.mxu0 0.0
    %2326 = vmatprep.subr.mxu0 0.0
    %2327 = vmatpush2.msra.mxu0 0.0
    %2328 = vmatprep.subr.mxu0 0.0
    %2329 = vmatpush2.msra.mxu0 0.0
    %2330 = vmatprep.subr.mxu0 0.0
    %2331 = vmatpush2.msra.mxu0 0.0
    %2332 = vmatprep.subr.mxu0 0.0
    %2333 = vmatpush2.msra.mxu0 0.0
    %2334 = vmatprep.subr.mxu0 0.0
    %2335 = vmatpush2.msra.mxu0 0.0
    %2336 = vmatprep.subr.mxu0 0.0
    %2337 = vmatpush2.msra.mxu0 0.0
    %2338 = vmatprep.subr.mxu0 0.0
    %2339 = vmatpush2.msra.mxu0 0.0
    %2340 = vmatprep.subr.mxu0 0.0
    %2341 = vmatpush2.msra.mxu0 0.0
    %2342 = vmatprep.subr.mxu0 0.0
    %2343 = vmatpush2.msra.mxu0 0.0
    %2344 = vmatprep.subr.mxu0 0.0
    %2345 = vmatpush2.msra.mxu0 0.0
    %2346 = vmatprep.subr.mxu0 0.0
    %2347 = vmatpush2.msra.mxu0 0.0
    %2348 = vmatprep.subr.mxu0 0.0
    %2349 = vmatpush2.msra.mxu0 0.0
    %2350 = vmatprep.mubr.f32.mxu0 0.0
    %2351 = vmatmul.mubr.f32.gmra.mxu0 %v2284
    %v2352 = vpop.f32.mrf.mxu0
    %v2353 = vadd.f32 0.0, %v2352
    %v2354 = vpop.f32.mrf.mxu0
    %v2355 = vadd.f32 0.0, %v2354
    %2356 = vdwg.mxu0
    %v2357 = vlaneseq
    %v2358 = vshrl.u32 %v2357, 7
    %v2359 = vsub.s32 0, %v2358
    %v2360 = vrot.slane %v2279, %v2359
    %v2361 = vlaneseq
    %v2362 = vshrl.u32 %v2361, 7
    %v2363 = vsub.s32 0, %v2362
    %v2364 = vrot.slane %v2281, %v2363
    %v2365 = vmul.f32 %v1951, %v2360
    %v2366 = vmul.f32 %v1953, %v2364
    %v2367 = vmul.f32 %v1955, %v2360
    %v2368 = vmul.f32 %v1957, %v2364
    %v2369 = vlaneseq
    %v2370 = vshrl.u32 %v2369, 7
    %v2371 = vsub.s32 0, %v2370
    %v2372 = vrot.slane %v2353, %v2371
    %v2373 = vlaneseq
    %v2374 = vshrl.u32 %v2373, 7
    %v2375 = vsub.s32 0, %v2374
    %v2376 = vrot.slane %v2355, %v2375
    %v2377 = vadd.f32 %v2365, %v2372
    %v2378 = vadd.f32 %v2366, %v2376
    %v2379 = vadd.f32 %v2367, %v2372
    %v2380 = vadd.f32 %v2368, %v2376
    %v2381 = vmax.f32 %v2377, 0.0
    %v2382 = vmax.f32 %v2378, 0.0
    %v2383 = vmax.f32 %v2379, 0.0
    %v2384 = vmax.f32 %v2380, 0.0
    %v2385 = vsel %vm948, %v2381, 0.0
    %v2386 = vrot.slane %v2385, 4
    %v2387 = vadd.f32 %v2385, %v2386
    %v2388 = vrot.slane %v2387, 2
    %v2389 = vadd.f32 %v2387, %v2388
    %v2390 = vrot.slane %v2389, 1
    %v2391 = vadd.f32 %v2389, %v2390
    %vm2392 = vcmask 521216
    %v2393 = vsel %vm2392, %v2382, 0.0
    %v2394 = vrot.slane %v2393, 4
    %v2395 = vadd.f32 %v2393, %v2394
    %v2396 = vrot.slane %v2395, 2
    %v2397 = vadd.f32 %v2395, %v2396
    %v2398 = vrot.slane %v2397, 1
    %v2399 = vadd.f32 %v2397, %v2398
    %v2404 = vrot.slane %v2381, 6
    %v2405 = vrot.slane %v2383, 6
    %v2406 = vsel %vm517, %v2404, %v2405
    %v2407 = vrot.slane %v2382, 6
    %v2408 = vrot.slane %v2384, 6
    %v2409 = vsel %vm517, %v2407, %v2408
    %v2412 = vsel %vm948, %v2406, 0.0
    %v2413 = vrot.slane %v2412, 4
    %v2414 = vadd.f32 %v2412, %v2413
    %v2415 = vrot.slane %v2414, 2
    %v2416 = vadd.f32 %v2414, %v2415
    %v2417 = vrot.slane %v2416, 1
    %v2418 = vadd.f32 %v2416, %v2417
    %v2419 = vsel %vm2392, %v2409, 0.0
    %v2420 = vrot.slane %v2419, 4
    %v2421 = vadd.f32 %v2419, %v2420
    %v2422 = vrot.slane %v2421, 2
    %v2423 = vadd.f32 %v2421, %v2422
    %v2424 = vrot.slane %v2423, 1
    %v2425 = vadd.f32 %v2423, %v2424
    %v2426 = vsel %vm942, %v2391, %v2418
    %v2427 = vsel %vm942, %v2399, %v2425
    %v2429 = vsel %vm607, %v2427, 0
    %2431 = vmatprep.subr.mxu0 0.0
    %2432 = vmatpush1.msra.mxu0 %v2009
    %2433 = vmatprep.subr.mxu0 0.0
    %2434 = vmatpush1.msra.mxu0 %v2008
    %2435 = vmatprep.subr.mxu0 0.0
    %2436 = vmatpush1.msra.mxu0 %v2007
    %2437 = vmatprep.subr.mxu0 0.0
    %2438 = vmatpush1.msra.mxu0 %v546
    %2439 = vmatprep.subr.mxu0 0.0
    %2440 = vmatpush1.msra.mxu0 %v2009
    %2441 = vmatprep.subr.mxu0 0.0
    %2442 = vmatpush1.msra.mxu0 %v2008
    %2443 = vmatprep.subr.mxu0 0.0
    %2444 = vmatpush1.msra.mxu0 %v2007
    %2445 = vmatprep.subr.mxu0 0.0
    %2446 = vmatpush1.msra.mxu0 %v546
    %2447 = vmatprep.subr.mxu0 0.0
    %2448 = vmatpush1.msra.mxu0 %v2009
    %2449 = vmatprep.subr.mxu0 0.0
    %2450 = vmatpush1.msra.mxu0 %v2008
    %2451 = vmatprep.subr.mxu0 0.0
    %2452 = vmatpush1.msra.mxu0 %v2007
    %2453 = vmatprep.subr.mxu0 0.0
    %2454 = vmatpush1.msra.mxu0 %v546
    %2455 = vmatprep.subr.mxu0 0.0
    %2456 = vmatpush1.msra.mxu0 %v2009
    %2457 = vmatprep.subr.mxu0 0.0
    %2458 = vmatpush1.msra.mxu0 %v2008
    %2459 = vmatprep.subr.mxu0 0.0
    %2460 = vmatpush1.msra.mxu0 %v2007
    %2461 = vmatprep.subr.mxu0 0.0
    %2462 = vmatpush1.msra.mxu0 %v546
    %2463 = vmatprep.subr.mxu0 0.0
    %2464 = vmatpush2.msra.mxu0 0.0
    %2465 = vmatprep.subr.mxu0 0.0
    %2466 = vmatpush2.msra.mxu0 0.0
    %2467 = vmatprep.subr.mxu0 0.0
    %2468 = vmatpush2.msra.mxu0 0.0
    %2469 = vmatprep.subr.mxu0 0.0
    %2470 = vmatpush2.msra.mxu0 0.0
    %2471 = vmatprep.subr.mxu0 0.0
    %2472 = vmatpush2.msra.mxu0 0.0
    %2473 = vmatprep.subr.mxu0 0.0
    %2474 = vmatpush2.msra.mxu0 0.0
    %2475 = vmatprep.subr.mxu0 0.0
    %2476 = vmatpush2.msra.mxu0 0.0
    %2477 = vmatprep.subr.mxu0 0.0
    %2478 = vmatpush2.msra.mxu0 0.0
    %2479 = vmatprep.subr.mxu0 0.0
    %2480 = vmatpush2.msra.mxu0 %v2009
    %2481 = vmatprep.subr.mxu0 0.0
    %2482 = vmatpush2.msra.mxu0 %v2008
    %2483 = vmatprep.subr.mxu0 0.0
    %2484 = vmatpush2.msra.mxu0 %v2007
    %2485 = vmatprep.subr.mxu0 0.0
    %2486 = vmatpush2.msra.mxu0 %v546
    %2487 = vmatprep.subr.mxu0 0.0
    %2488 = vmatpush2.msra.mxu0 %v2009
    %2489 = vmatprep.subr.mxu0 0.0
    %2490 = vmatpush2.msra.mxu0 %v2008
    %2491 = vmatprep.subr.mxu0 0.0
    %2492 = vmatpush2.msra.mxu0 %v2007
    %2493 = vmatprep.subr.mxu0 0.0
    %2494 = vmatpush2.msra.mxu0 %v546
    %2495 = vmatprep.mubr.f32.mxu0 %v2429
    %2496 = vmatmul.mubr.f32.gmra.mxu0 %v2426
    %v2497 = vpop.f32.mrf.mxu0
    %v2498 = vadd.f32 0.0, %v2497
    %v2499 = vpop.f32.mrf.mxu0
    %2500 = vdwg.mxu0
    %v2501 = vmul.f32 %v2498, 0.027777778
    %v2502 = vld [vmem:[%s2 + $0x8] sm:$0xff]
    %v2503 = vld [vmem:[%s2 + $0x10] sm:$0xff]
    %v2504 = vld [vmem:[%s2 + $0x18] sm:$0xff]
    %v2505 = vld [vmem:[%s2 + $0x20] sm:$0xff]
    %v2506 = vld [vmem:[%s2 + $0x28] sm:$0xff]
    %v2507 = vld [vmem:[%s2 + $0x30] sm:$0xff]
    %v2508 = vld [vmem:[%s2 + $0x38] sm:$0xff]
    %v2509 = vld [vmem:[%s2 + $0x40] sm:$0xff]
    %v2510 = vld [vmem:[%s2 + $0x48] sm:$0x7]
    %v2511 = vld [vmem:[%s2 + $0x4] sm:$0x1]
    %v2512 = vld [vmem:[%s2 + $0x5] sm:$0x1]
    %v2513 = vld [vmem:[%s2 + $0x6] sm:$0x1]
    %v2514 = vlaneseq
    %v2515 = vshrl.u32 %v2514, 7
    %v2516 = vsub.s32 0, %v2515
    %v2517 = vrot.slane %v2511, %v2516
    %v2519 = vsel %vm599, %v2501, 0
    %2521 = vmatprep.subr.mxu0 0.0
    %2522 = vmatpush1.msra.mxu0 0.0
    %2523 = vmatprep.subr.mxu0 0.0
    %2524 = vmatpush1.msra.mxu0 0.0
    %2525 = vmatprep.subr.mxu0 0.0
    %2526 = vmatpush1.msra.mxu0 0.0
    %2527 = vmatprep.subr.mxu0 0.0
    %2528 = vmatpush1.msra.mxu0 0.0
    %2529 = vmatprep.subr.mxu0 0.0
    %2530 = vmatpush1.msra.mxu0 0.0
    %2531 = vmatprep.subr.mxu0 0.0
    %2532 = vmatpush1.msra.mxu0 0.0
    %2533 = vmatprep.subr.mxu0 0.0
    %2534 = vmatpush1.msra.mxu0 0.0
    %2535 = vmatprep.subr.mxu0 0.0
    %2536 = vmatpush1.msra.mxu0 0.0
    %2537 = vmatprep.subr.mxu0 0.0
    %2538 = vmatpush1.msra.mxu0 0.0
    %2539 = vmatprep.subr.mxu0 0.0
    %2540 = vmatpush1.msra.mxu0 0.0
    %2541 = vmatprep.subr.mxu0 0.0
    %2542 = vmatpush1.msra.mxu0 0.0
    %2543 = vmatprep.subr.mxu0 0.0
    %2544 = vmatpush1.msra.mxu0 0.0
    %2545 = vmatprep.subr.mxu0 0.0
    %2546 = vmatpush1.msra.mxu0 %v2505
    %2547 = vmatprep.subr.mxu0 0.0
    %2548 = vmatpush1.msra.mxu0 %v2504
    %2549 = vmatprep.subr.mxu0 0.0
    %2550 = vmatpush1.msra.mxu0 %v2503
    %2551 = vmatprep.subr.mxu0 0.0
    %2552 = vmatpush1.msra.mxu0 %v2502
    %2553 = vmatprep.subr.mxu0 0.0
    %2554 = vmatpush2.msra.mxu0 0.0
    %2555 = vmatprep.subr.mxu0 0.0
    %2556 = vmatpush2.msra.mxu0 0.0
    %2557 = vmatprep.subr.mxu0 0.0
    %2558 = vmatpush2.msra.mxu0 0.0
    %2559 = vmatprep.subr.mxu0 0.0
    %2560 = vmatpush2.msra.mxu0 0.0
    %2561 = vmatprep.subr.mxu0 0.0
    %2562 = vmatpush2.msra.mxu0 0.0
    %2563 = vmatprep.subr.mxu0 0.0
    %2564 = vmatpush2.msra.mxu0 0.0
    %2565 = vmatprep.subr.mxu0 0.0
    %2566 = vmatpush2.msra.mxu0 0.0
    %2567 = vmatprep.subr.mxu0 0.0
    %2568 = vmatpush2.msra.mxu0 0.0
    %2569 = vmatprep.subr.mxu0 0.0
    %2570 = vmatpush2.msra.mxu0 0.0
    %2571 = vmatprep.subr.mxu0 0.0
    %2572 = vmatpush2.msra.mxu0 0.0
    %2573 = vmatprep.subr.mxu0 0.0
    %2574 = vmatpush2.msra.mxu0 0.0
    %2575 = vmatprep.subr.mxu0 0.0
    %2576 = vmatpush2.msra.mxu0 0.0
    %2577 = vmatprep.subr.mxu0 0.0
    %2578 = vmatpush2.msra.mxu0 0.0
    %2579 = vmatprep.subr.mxu0 0.0
    %2580 = vmatpush2.msra.mxu0 0.0
    %2581 = vmatprep.subr.mxu0 0.0
    %2582 = vmatpush2.msra.mxu0 0.0
    %2583 = vmatprep.subr.mxu0 0.0
    %2584 = vmatpush2.msra.mxu0 0.0
    %2585 = vmatprep.mubr.f32.mxu0 0.0
    %2586 = vmatmul.mubr.f32.gmra.mxu0 %v2519
    %v2587 = vpop.f32.mrf.mxu0
    %v2588 = vadd.f32 %v2517, %v2587
    %v2589 = vpop.f32.mrf.mxu0
    %2590 = vdwg.mxu0
    %v2591 = vsub.f32 0.0, %v2588
    %v2592 = vmul.f32 %v2591, 1.442695
    %v2593 = vpow.pop %v2592
    %v2594 = vadd.f32 %v2593, 1.0
    %v2595 = vrcp.pop %v2594
    %v2596 = vmul.f32 %v2501, %v2595
    %v2597 = vlaneseq
    %v2598 = vshrl.u32 %v2597, 7
    %v2599 = vsub.s32 0, %v2598
    %v2600 = vrot.slane %v2512, %v2599
    %v2602 = vsel %vm599, %v2596, 0
    %2604 = vmatprep.subr.mxu0 0.0
    %2605 = vmatpush1.msra.mxu0 0.0
    %2606 = vmatprep.subr.mxu0 0.0
    %2607 = vmatpush1.msra.mxu0 0.0
    %2608 = vmatprep.subr.mxu0 0.0
    %2609 = vmatpush1.msra.mxu0 0.0
    %2610 = vmatprep.subr.mxu0 0.0
    %2611 = vmatpush1.msra.mxu0 0.0
    %2612 = vmatprep.subr.mxu0 0.0
    %2613 = vmatpush1.msra.mxu0 0.0
    %2614 = vmatprep.subr.mxu0 0.0
    %2615 = vmatpush1.msra.mxu0 0.0
    %2616 = vmatprep.subr.mxu0 0.0
    %2617 = vmatpush1.msra.mxu0 0.0
    %2618 = vmatprep.subr.mxu0 0.0
    %2619 = vmatpush1.msra.mxu0 0.0
    %2620 = vmatprep.subr.mxu0 0.0
    %2621 = vmatpush1.msra.mxu0 0.0
    %2622 = vmatprep.subr.mxu0 0.0
    %2623 = vmatpush1.msra.mxu0 0.0
    %2624 = vmatprep.subr.mxu0 0.0
    %2625 = vmatpush1.msra.mxu0 0.0
    %2626 = vmatprep.subr.mxu0 0.0
    %2627 = vmatpush1.msra.mxu0 0.0
    %2628 = vmatprep.subr.mxu0 0.0
    %2629 = vmatpush1.msra.mxu0 %v2509
    %2630 = vmatprep.subr.mxu0 0.0
    %2631 = vmatpush1.msra.mxu0 %v2508
    %2632 = vmatprep.subr.mxu0 0.0
    %2633 = vmatpush1.msra.mxu0 %v2507
    %2634 = vmatprep.subr.mxu0 0.0
    %2635 = vmatpush1.msra.mxu0 %v2506
    %2636 = vmatprep.subr.mxu0 0.0
    %2637 = vmatpush2.msra.mxu0 0.0
    %2638 = vmatprep.subr.mxu0 0.0
    %2639 = vmatpush2.msra.mxu0 0.0
    %2640 = vmatprep.subr.mxu0 0.0
    %2641 = vmatpush2.msra.mxu0 0.0
    %2642 = vmatprep.subr.mxu0 0.0
    %2643 = vmatpush2.msra.mxu0 0.0
    %2644 = vmatprep.subr.mxu0 0.0
    %2645 = vmatpush2.msra.mxu0 0.0
    %2646 = vmatprep.subr.mxu0 0.0
    %2647 = vmatpush2.msra.mxu0 0.0
    %2648 = vmatprep.subr.mxu0 0.0
    %2649 = vmatpush2.msra.mxu0 0.0
    %2650 = vmatprep.subr.mxu0 0.0
    %2651 = vmatpush2.msra.mxu0 0.0
    %2652 = vmatprep.subr.mxu0 0.0
    %2653 = vmatpush2.msra.mxu0 0.0
    %2654 = vmatprep.subr.mxu0 0.0
    %2655 = vmatpush2.msra.mxu0 0.0
    %2656 = vmatprep.subr.mxu0 0.0
    %2657 = vmatpush2.msra.mxu0 0.0
    %2658 = vmatprep.subr.mxu0 0.0
    %2659 = vmatpush2.msra.mxu0 0.0
    %2660 = vmatprep.subr.mxu0 0.0
    %2661 = vmatpush2.msra.mxu0 0.0
    %2662 = vmatprep.subr.mxu0 0.0
    %2663 = vmatpush2.msra.mxu0 0.0
    %2664 = vmatprep.subr.mxu0 0.0
    %2665 = vmatpush2.msra.mxu0 0.0
    %2666 = vmatprep.subr.mxu0 0.0
    %2667 = vmatpush2.msra.mxu0 0.0
    %2668 = vmatprep.mubr.f32.mxu0 0.0
    %2669 = vmatmul.mubr.f32.gmra.mxu0 %v2602
    %v2670 = vpop.f32.mrf.mxu0
    %v2671 = vadd.f32 %v2600, %v2670
    %v2672 = vpop.f32.mrf.mxu0
    %2673 = vdwg.mxu0
    %v2674 = vlaneseq
    %v2675 = vshrl.u32 %v2674, 7
    %v2676 = vsub.s32 0, %v2675
    %v2677 = vrot.slane %v2513, %v2676
    %vm2678 = vcmask 23552
    %v2680 = vsel %vm2678, %v2671, 0
    %v2683 = vsel %vm979, %v2510, 0
    %2685 = vmatprep.subr.mxu0 0.0
    %2686 = vmatpush1.msra.mxu0 0.0
    %2687 = vmatprep.subr.mxu0 0.0
    %2688 = vmatpush1.msra.mxu0 0.0
    %2689 = vmatprep.subr.mxu0 0.0
    %2690 = vmatpush1.msra.mxu0 0.0
    %2691 = vmatprep.subr.mxu0 0.0
    %2692 = vmatpush1.msra.mxu0 0.0
    %2693 = vmatprep.subr.mxu0 0.0
    %2694 = vmatpush1.msra.mxu0 0.0
    %2695 = vmatprep.subr.mxu0 0.0
    %2696 = vmatpush1.msra.mxu0 0.0
    %2697 = vmatprep.subr.mxu0 0.0
    %2698 = vmatpush1.msra.mxu0 0.0
    %2699 = vmatprep.subr.mxu0 0.0
    %2700 = vmatpush1.msra.mxu0 0.0
    %2701 = vmatprep.subr.mxu0 0.0
    %2702 = vmatpush1.msra.mxu0 0.0
    %2703 = vmatprep.subr.mxu0 0.0
    %2704 = vmatpush1.msra.mxu0 0.0
    %2705 = vmatprep.subr.mxu0 0.0
    %2706 = vmatpush1.msra.mxu0 0.0
    %2707 = vmatprep.subr.mxu0 0.0
    %2708 = vmatpush1.msra.mxu0 0.0
    %2709 = vmatprep.subr.mxu0 0.0
    %2710 = vmatpush1.msra.mxu0 0.0
    %2711 = vmatprep.subr.mxu0 0.0
    %2712 = vmatpush1.msra.mxu0 0.0
    %2713 = vmatprep.subr.mxu0 0.0
    %2714 = vmatpush1.msra.mxu0 0.0
    %2715 = vmatprep.subr.mxu0 0.0
    %2716 = vmatpush1.msra.mxu0 %v2683
    %2717 = vmatprep.subr.mxu0 0.0
    %2718 = vmatpush2.msra.mxu0 0.0
    %2719 = vmatprep.subr.mxu0 0.0
    %2720 = vmatpush2.msra.mxu0 0.0
    %2721 = vmatprep.subr.mxu0 0.0
    %2722 = vmatpush2.msra.mxu0 0.0
    %2723 = vmatprep.subr.mxu0 0.0
    %2724 = vmatpush2.msra.mxu0 0.0
    %2725 = vmatprep.subr.mxu0 0.0
    %2726 = vmatpush2.msra.mxu0 0.0
    %2727 = vmatprep.subr.mxu0 0.0
    %2728 = vmatpush2.msra.mxu0 0.0
    %2729 = vmatprep.subr.mxu0 0.0
    %2730 = vmatpush2.msra.mxu0 0.0
    %2731 = vmatprep.subr.mxu0 0.0
    %2732 = vmatpush2.msra.mxu0 0.0
    %2733 = vmatprep.subr.mxu0 0.0
    %2734 = vmatpush2.msra.mxu0 0.0
    %2735 = vmatprep.subr.mxu0 0.0
    %2736 = vmatpush2.msra.mxu0 0.0
    %2737 = vmatprep.subr.mxu0 0.0
    %2738 = vmatpush2.msra.mxu0 0.0
    %2739 = vmatprep.subr.mxu0 0.0
    %2740 = vmatpush2.msra.mxu0 0.0
    %2741 = vmatprep.subr.mxu0 0.0
    %2742 = vmatpush2.msra.mxu0 0.0
    %2743 = vmatprep.subr.mxu0 0.0
    %2744 = vmatpush2.msra.mxu0 0.0
    %2745 = vmatprep.subr.mxu0 0.0
    %2746 = vmatpush2.msra.mxu0 0.0
    %2747 = vmatprep.subr.mxu0 0.0
    %2748 = vmatpush2.msra.mxu0 0.0
    %2749 = vmatprep.mubr.f32.mxu0 0.0
    %2750 = vmatmul.mubr.f32.gmra.mxu0 %v2680
    %v2751 = vpop.f32.mrf.mxu0
    %v2752 = vadd.f32 %v2677, %v2751
    %v2753 = vpop.f32.mrf.mxu0
    %2754 = vdwg.mxu0
    %v2755 = vsub.f32 0.0, %v2752
    %v2756 = vmul.f32 %v2755, 1.442695
    %v2757 = vpow.pop %v2756
    %v2758 = vadd.f32 %v2757, 1.0
    %v2759 = vrcp.pop %v2758
    %v2760 = vmul.f32 %v2671, %v2759
    %vm2761 = vcmask 17408
    %v2762 = vsel %vm2761, %v2760, -inf
    %2763 = vmax.xlane.f32.xlu0 %v2762
    %v2764 = vpop.xlane.xlu0 %2763
    %v2765 = vsub.f32 %v2760, %v2764
    %v2766 = vmul.f32 %v2765, 1.442695
    %v2767 = vpow.pop %v2766
    %v2768 = vsel %vm2761, %v2767, 0.0
    %2769 = vadd.xlane.f32.xlu0 %v2768
    %v2770 = vpop.xlane.xlu0 %2769
    %v2771 = vrcp.pop %v2770
    %v2772 = vmul.f32 %v2767, %v2771
    %2773 = vst.msk [vmem:[#allocation4] sm:$0x3] %vm2761, %v2772
    // Predicated region
    $region48: #{gate_pallas.1} parent=1 // pred_check
      _
    $region49: #{gate_pallas.1} parent=1 // pred_check_branch
      %2775 = sbr.rel (0) target = $region51
    $region50: #{gate_pallas.1} parent=1 // pred_region
      %s2777 = ssub.s32 32, 32
      %2778 = vsyncadd [#allocation5], %s2777
      %s2780 = sshll.u32 [#allocation4], 4
      %s2781 = int_to_ptr.vmem [resolvable:$true] %s2780
      %2783 = dma.vmem_to_hbm [thread:$0]  %s2781, 32, %s4, [#allocation5]
    $region51: #{gate_pallas.1} parent=1 // pred_fallthru
      _
    // Predicated region
    $region52: #{gate_pallas.1} parent=1 // pred_check
      _
    $region53: #{gate_pallas.1} parent=1 // pred_check_branch
      %2785 = sbr.rel (0) target = $region55
    $region54: #{gate_pallas.1} parent=1 // pred_region
      %2786 = dma.done [#allocation5], 32
    $region55: #{gate_pallas.1} parent=1 // pred_fallthru
      _
    %2787 = vsyncpa [#allocation5], 1
  %2788 = vsyncmov [#allocation3]
  %s2789 = vpop.sfrf %2788
  %p2790 = scmp.eq.s32.totalorder %s2789, 0
  %p2791 = pneg %p2790
  %2793 = shalt.err (%p2791)

</llo_original>
